<compile_context>
chip_gen: v5e
topology: v5e:2x2
jax: 0.10.0
libtpu: 0.0.40
codegen_flags: <defaults>
</compile_context>

<pallas_src>
import functools

import jax
import jax.numpy as jnp
from jax.experimental import pallas as pl
from jax.experimental.pallas import tpu as pltpu  # noqa: F401  (kept for memory-space use)

LANE = 128          # lane-dense feature padding (native MXU width on v5e; floor on v6e/v7x)
SUBLANE_BF16 = 16   # bf16 packs 16 rows per vreg


def _round_up(x, m):
    return (x + m - 1) // m * m


# ----------------------------- fused Pallas kernel ------------------------------

def _fused_gcn_kernel(a_ref, x_ref,
                      w1_ref, b1_ref, w2_ref, b2_ref, w3_ref, b3_ref,
                      fw1_ref, fb1_ref, fw2_ref, fb2_ref,
                      o_ref):
    """conv1->relu -> conv2->relu -> conv3->relu -> fc1->relu -> fc2->sigmoid.

    Everything lives in VMEM for the whole forward.  H@W and fc matmuls take bf16
    operands with f32 MXU accumulation; the tiny aggregation A_hat @ (HW) stays f32.
    """
    a = a_ref[...]  # [N_pad, N_pad] f32 normalized adjacency (kept f32: precision + no cast)

    def gcn(h_bf16, w_ref, b_ref):
        # GCNConv: A_hat @ (H @ W) + b, fused ReLU.  H@W first since F << N.
        xw = jnp.dot(h_bf16, w_ref[...], preferred_element_type=jnp.float32)
        agg = jnp.dot(a, xw, preferred_element_type=jnp.float32)
        return jnp.maximum(agg + b_ref[...], 0.0).astype(jnp.bfloat16)

    h = gcn(x_ref[...], w1_ref, b1_ref)
    h = gcn(h, w2_ref, b2_ref)
    h = gcn(h, w3_ref, b3_ref)
    # x.flatten(1) on a 2D [N, F] tensor is a no-op.
    h = jnp.dot(h, fw1_ref[...], preferred_element_type=jnp.float32) + fb1_ref[...]
    h = jnp.maximum(h, 0.0).astype(jnp.bfloat16)
    y = jnp.dot(h, fw2_ref[...], preferred_element_type=jnp.float32) + fb2_ref[...]
    o_ref[...] = jax.nn.sigmoid(y)


def _full_spec(shape):
    # Whole-array block (block_shape == full array dims), no grid.
    return pl.BlockSpec(shape, lambda: tuple(0 for _ in shape))


# ------------------------------- glue (JAX) --------------------------------

def build_norm_adj(edge_index, num_nodes):
    """Dense symmetric-normalized adjacency with exactly-once self-loops (PyG gcn_norm)."""
    src, dst = edge_index[0], edge_index[1]
    a = jnp.zeros((num_nodes, num_nodes), jnp.float32)
    a = a.at[src, dst].set(1.0)
    a = a.at[dst, src].set(1.0)          # undirected graph
    eye = jnp.eye(num_nodes, dtype=jnp.float32)
    a = a * (1.0 - eye) + eye            # de-dup any accidental self-loops, then add one
    deg = jnp.sum(a, axis=1)
    dinv = jnp.where(deg > 0, 1.0 / jnp.sqrt(deg), 0.0)
    return a * dinv[:, None] * dinv[None, :]


def glorot(key, shape):
    fan_in, fan_out = shape[0], shape[1]
    limit = jnp.sqrt(6.0 / (fan_in + fan_out))
    return jax.random.uniform(key, shape, jnp.float32, -limit, limit)


def init_params(key, in_channels, out_channels, flat_dim):
    ks = jax.random.split(key, 5)
    c1, c2, c3 = in_channels * 2, in_channels * 4, in_channels * 2
    return {
        "conv1_w": glorot(ks[0], (in_channels, c1)),
        "conv1_b": jnp.zeros((1, c1), jnp.float32),
        "conv2_w": glorot(ks[1], (c1, c2)),
        "conv2_b": jnp.zeros((1, c2), jnp.float32),
        "conv3_w": glorot(ks[2], (c2, c3)),
        "conv3_b": jnp.zeros((1, c3), jnp.float32),
        # TODO(synk): reference module hard-codes nn.Linear(21, 1024); that in_features is
        # inconsistent with conv3's per-node output width (2*in_channels).  We use the
        # actual flattened per-node dim so the forward runs.
        "fc1_w": glorot(ks[3], (flat_dim, 1024)),
        "fc1_b": jnp.zeros((1, 1024), jnp.float32),
        "fc2_w": glorot(ks[4], (1024, out_channels)),
        "fc2_b": jnp.zeros((1, out_channels), jnp.float32),
    }


def _pad_to(arr, shape, dtype):
    out = jnp.zeros(shape, dtype)
    return out.at[: arr.shape[0], : arr.shape[1]].set(arr.astype(dtype))


def prepare_model(params, a_norm, num_nodes):
    """ONE-TIME preparation: pad A_hat / weights / biases to lane-dense shapes and cast
    weights to bf16.  This was previously done per forward call (~0.6 MiB of HBM pad/convert
    traffic each call); now the jitted forward receives the padded operands directly."""
    n_pad = _round_up(num_nodes, SUBLANE_BF16)

    c_in = params["conv1_w"].shape[0]
    c1 = params["conv1_w"].shape[1]
    c2 = params["conv2_w"].shape[1]
    c3 = params["conv3_w"].shape[1]
    f1 = params["fc1_w"].shape[1]
    out_c = params["fc2_w"].shape[1]

    c_in_p = _round_up(c_in, LANE)
    c1_p = _round_up(c1, LANE)
    c2_p = _round_up(c2, LANE)
    c3_p = _round_up(c3, LANE)
    f1_p = _round_up(f1, LANE)
    out_p = _round_up(out_c, LANE)

    bf16, f32 = jnp.bfloat16, jnp.float32
    prepared = {
        "a":   _pad_to(a_norm, (n_pad, n_pad), f32),   # f32 adjacency (precision + no cast)
        "w1":  _pad_to(params["conv1_w"], (c_in_p, c1_p), bf16),
        "b1":  _pad_to(params["conv1_b"], (1, c1_p), f32),
        "w2":  _pad_to(params["conv2_w"], (c1_p, c2_p), bf16),
        "b2":  _pad_to(params["conv2_b"], (1, c2_p), f32),
        "w3":  _pad_to(params["conv3_w"], (c2_p, c3_p), bf16),
        "b3":  _pad_to(params["conv3_b"], (1, c3_p), f32),
        "fw1": _pad_to(params["fc1_w"], (c3_p, f1_p), bf16),
        "fb1": _pad_to(params["fc1_b"], (1, f1_p), f32),
        "fw2": _pad_to(params["fc2_w"], (f1_p, out_p), bf16),
        "fb2": _pad_to(params["fc2_b"], (1, out_p), f32),
    }
    return jax.tree_util.tree_map(jax.block_until_ready, prepared)


def gcn_model_forward(prepared, x, *, out_channels):
    """Per-call work: pad x (tiny), run ONE fused Pallas kernel, slice the real outputs."""
    n = x.shape[0]
    n_pad = prepared["a"].shape[0]
    c_in_p = prepared["w1"].shape[0]
    out_p = prepared["fw2"].shape[1]

    x_pad = jnp.zeros((n_pad, c_in_p), jnp.bfloat16)
    x_pad = x_pad.at[:n, : x.shape[1]].set(x.astype(jnp.bfloat16))

    operands = (
        prepared["a"], x_pad,
        prepared["w1"], prepared["b1"],
        prepared["w2"], prepared["b2"],
        prepared["w3"], prepared["b3"],
        prepared["fw1"], prepared["fb1"],
        prepared["fw2"], prepared["fb2"],
    )

    out_pad = pl.pallas_call(
        _fused_gcn_kernel,
        out_shape=jax.ShapeDtypeStruct((n_pad, out_p), jnp.float32),
        in_specs=[_full_spec(op.shape) for op in operands],
        out_specs=_full_spec((n_pad, out_p)),
        cost_estimate=pl.CostEstimate(
            flops=10_500_000, transcendentals=2_048, bytes_accessed=650_000),
    )(*operands)

    return out_pad[:n, :out_channels]


# --------------------------------- main -------------------------------------

if __name__ == "__main__":
    key = jax.random.PRNGKey(0)
    k_x, k_e, k_p = jax.random.split(key, 3)

    num_nodes = 16
    in_channels = 4
    out_channels = 2

    # Node features [N, in_channels]
    x = jax.random.normal(k_x, (num_nodes, in_channels), jnp.float32)

    # Deterministic small graph: a ring plus a few random chords.  edge_index: [2, E]
    ring_src = jnp.arange(num_nodes, dtype=jnp.int32)
    ring_dst = (ring_src + 1) % num_nodes
    rand_src = jax.random.randint(k_e, (8,), 0, num_nodes, jnp.int32)
    rand_dst = jax.random.randint(jax.random.fold_in(k_e, 1), (8,), 0, num_nodes, jnp.int32)
    edge_index = jnp.stack([jnp.concatenate([ring_src, rand_src]),
                            jnp.concatenate([ring_dst, rand_dst])], axis=0)

    a_norm = build_norm_adj(edge_index, num_nodes)

    flat_dim = in_channels * 2   # per-node feature dim after conv3 (flatten(1) is identity)
    params = init_params(k_p, in_channels, out_channels, flat_dim)

    # One-time padding / bf16 conversion of all parameters + adjacency.
    prepared = prepare_model(params, a_norm, num_nodes)

    fwd = jax.jit(functools.partial(gcn_model_forward, out_channels=out_channels))
    out = fwd(prepared, x)
    jax.block_until_ready(out)

    assert out.shape == (num_nodes, out_channels)
    assert bool(jnp.all((out >= 0.0) & (out <= 1.0)))  # sigmoid range
    print("KERNEL_OK")
</pallas_src>

<mosaic_0001>
module attributes {stable_mosaic.version = 11 : i64} {
  func.func @_fused_gcn_kernel(%arg0: memref<16x16xf32, #tpu.memory_space<vmem>>, %arg1: memref<16x128xbf16, #tpu.memory_space<vmem>>, %arg2: memref<128x128xbf16, #tpu.memory_space<vmem>>, %arg3: memref<1x128xf32, #tpu.memory_space<vmem>>, %arg4: memref<128x128xbf16, #tpu.memory_space<vmem>>, %arg5: memref<1x128xf32, #tpu.memory_space<vmem>>, %arg6: memref<128x128xbf16, #tpu.memory_space<vmem>>, %arg7: memref<1x128xf32, #tpu.memory_space<vmem>>, %arg8: memref<128x1024xbf16, #tpu.memory_space<vmem>>, %arg9: memref<1x1024xf32, #tpu.memory_space<vmem>>, %arg10: memref<1024x128xbf16, #tpu.memory_space<vmem>>, %arg11: memref<1x128xf32, #tpu.memory_space<vmem>>, %arg12: memref<16x128xf32, #tpu.memory_space<vmem>>) attributes {dimension_semantics = [], scalar_prefetch = 0 : i64, scratch_operands = 0 : i64, tpu.core_type = #tpu.core_type<tc>} {
    %c0 = arith.constant 0 : index
    %c0_0 = arith.constant 0 : index
    %0 = vector.load %arg0[%c0, %c0_0] : memref<16x16xf32, #tpu.memory_space<vmem>>, vector<16x16xf32>
    %c0_1 = arith.constant 0 : index
    %c0_2 = arith.constant 0 : index
    %1 = vector.load %arg1[%c0_1, %c0_2] : memref<16x128xbf16, #tpu.memory_space<vmem>>, vector<16x128xbf16>
    %c0_3 = arith.constant 0 : index
    %c0_4 = arith.constant 0 : index
    %2 = vector.load %arg2[%c0_3, %c0_4] : memref<128x128xbf16, #tpu.memory_space<vmem>>, vector<128x128xbf16>
    %cst = arith.constant dense<0.000000e+00> : vector<16x128xf32>
    %3 = tpu.matmul %1, %2, %cst {dimension_numbers = #tpu.dot_dimension_numbers<[1], [0], [0], [1], [0, 0, 1, 1], [], []>} : vector<16x128xbf16>, vector<128x128xbf16>, vector<16x128xf32> -> vector<16x128xf32>
    %cst_5 = arith.constant dense<0.000000e+00> : vector<16x128xf32>
    %4 = tpu.matmul %0, %3, %cst_5 {dimension_numbers = #tpu.dot_dimension_numbers<[1], [0], [0], [1], [0, 0, 1, 1], [], []>} : vector<16x16xf32>, vector<16x128xf32>, vector<16x128xf32> -> vector<16x128xf32>
    %c0_6 = arith.constant 0 : index
    %c0_7 = arith.constant 0 : index
    %5 = vector.load %arg3[%c0_6, %c0_7] : memref<1x128xf32, #tpu.memory_space<vmem>>, vector<1x128xf32>
    %6 = vector.broadcast %5 : vector<1x128xf32> to vector<16x128xf32>
    %7 = arith.addf %4, %6 : vector<16x128xf32>
    %cst_8 = arith.constant 0.000000e+00 : f32
    %8 = vector.broadcast %cst_8 : f32 to vector<16x128xf32>
    %9 = arith.maximumf %7, %8 : vector<16x128xf32>
    %10 = arith.truncf %9 : vector<16x128xf32> to vector<16x128xbf16>
    %c0_9 = arith.constant 0 : index
    %c0_10 = arith.constant 0 : index
    %11 = vector.load %arg4[%c0_9, %c0_10] : memref<128x128xbf16, #tpu.memory_space<vmem>>, vector<128x128xbf16>
    %cst_11 = arith.constant dense<0.000000e+00> : vector<16x128xf32>
    %12 = tpu.matmul %10, %11, %cst_11 {dimension_numbers = #tpu.dot_dimension_numbers<[1], [0], [0], [1], [0, 0, 1, 1], [], []>} : vector<16x128xbf16>, vector<128x128xbf16>, vector<16x128xf32> -> vector<16x128xf32>
    %cst_12 = arith.constant dense<0.000000e+00> : vector<16x128xf32>
    %13 = tpu.matmul %0, %12, %cst_12 {dimension_numbers = #tpu.dot_dimension_numbers<[1], [0], [0], [1], [0, 0, 1, 1], [], []>} : vector<16x16xf32>, vector<16x128xf32>, vector<16x128xf32> -> vector<16x128xf32>
    %c0_13 = arith.constant 0 : index
    %c0_14 = arith.constant 0 : index
    %14 = vector.load %arg5[%c0_13, %c0_14] : memref<1x128xf32, #tpu.memory_space<vmem>>, vector<1x128xf32>
    %15 = vector.broadcast %14 : vector<1x128xf32> to vector<16x128xf32>
    %16 = arith.addf %13, %15 : vector<16x128xf32>
    %cst_15 = arith.constant 0.000000e+00 : f32
    %17 = vector.broadcast %cst_15 : f32 to vector<16x128xf32>
    %18 = arith.maximumf %16, %17 : vector<16x128xf32>
    %19 = arith.truncf %18 : vector<16x128xf32> to vector<16x128xbf16>
    %c0_16 = arith.constant 0 : index
    %c0_17 = arith.constant 0 : index
    %20 = vector.load %arg6[%c0_16, %c0_17] : memref<128x128xbf16, #tpu.memory_space<vmem>>, vector<128x128xbf16>
    %cst_18 = arith.constant dense<0.000000e+00> : vector<16x128xf32>
    %21 = tpu.matmul %19, %20, %cst_18 {dimension_numbers = #tpu.dot_dimension_numbers<[1], [0], [0], [1], [0, 0, 1, 1], [], []>} : vector<16x128xbf16>, vector<128x128xbf16>, vector<16x128xf32> -> vector<16x128xf32>
    %cst_19 = arith.constant dense<0.000000e+00> : vector<16x128xf32>
    %22 = tpu.matmul %0, %21, %cst_19 {dimension_numbers = #tpu.dot_dimension_numbers<[1], [0], [0], [1], [0, 0, 1, 1], [], []>} : vector<16x16xf32>, vector<16x128xf32>, vector<16x128xf32> -> vector<16x128xf32>
    %c0_20 = arith.constant 0 : index
    %c0_21 = arith.constant 0 : index
    %23 = vector.load %arg7[%c0_20, %c0_21] : memref<1x128xf32, #tpu.memory_space<vmem>>, vector<1x128xf32>
    %24 = vector.broadcast %23 : vector<1x128xf32> to vector<16x128xf32>
    %25 = arith.addf %22, %24 : vector<16x128xf32>
    %cst_22 = arith.constant 0.000000e+00 : f32
    %26 = vector.broadcast %cst_22 : f32 to vector<16x128xf32>
    %27 = arith.maximumf %25, %26 : vector<16x128xf32>
    %28 = arith.truncf %27 : vector<16x128xf32> to vector<16x128xbf16>
    %c0_23 = arith.constant 0 : index
    %c0_24 = arith.constant 0 : index
    %29 = vector.load %arg8[%c0_23, %c0_24] : memref<128x1024xbf16, #tpu.memory_space<vmem>>, vector<128x1024xbf16>
    %cst_25 = arith.constant dense<0.000000e+00> : vector<16x1024xf32>
    %30 = tpu.matmul %28, %29, %cst_25 {dimension_numbers = #tpu.dot_dimension_numbers<[1], [0], [0], [1], [0, 0, 1, 1], [], []>} : vector<16x128xbf16>, vector<128x1024xbf16>, vector<16x1024xf32> -> vector<16x1024xf32>
    %c0_26 = arith.constant 0 : index
    %c0_27 = arith.constant 0 : index
    %31 = vector.load %arg9[%c0_26, %c0_27] : memref<1x1024xf32, #tpu.memory_space<vmem>>, vector<1x1024xf32>
    %32 = vector.broadcast %31 : vector<1x1024xf32> to vector<16x1024xf32>
    %33 = arith.addf %30, %32 : vector<16x1024xf32>
    %cst_28 = arith.constant 0.000000e+00 : f32
    %34 = vector.broadcast %cst_28 : f32 to vector<16x1024xf32>
    %35 = arith.maximumf %33, %34 : vector<16x1024xf32>
    %36 = arith.truncf %35 : vector<16x1024xf32> to vector<16x1024xbf16>
    %c0_29 = arith.constant 0 : index
    %c0_30 = arith.constant 0 : index
    %37 = vector.load %arg10[%c0_29, %c0_30] : memref<1024x128xbf16, #tpu.memory_space<vmem>>, vector<1024x128xbf16>
    %cst_31 = arith.constant dense<0.000000e+00> : vector<16x128xf32>
    %38 = tpu.matmul %36, %37, %cst_31 {dimension_numbers = #tpu.dot_dimension_numbers<[1], [0], [0], [1], [0, 0, 1, 1], [], []>} : vector<16x1024xbf16>, vector<1024x128xbf16>, vector<16x128xf32> -> vector<16x128xf32>
    %c0_32 = arith.constant 0 : index
    %c0_33 = arith.constant 0 : index
    %39 = vector.load %arg11[%c0_32, %c0_33] : memref<1x128xf32, #tpu.memory_space<vmem>>, vector<1x128xf32>
    %40 = vector.broadcast %39 : vector<1x128xf32> to vector<16x128xf32>
    %41 = arith.addf %38, %40 : vector<16x128xf32>
    %42 = arith.negf %41 : vector<16x128xf32>
    %43 = math.exp %42 : vector<16x128xf32>
    %cst_34 = arith.constant 1.000000e+00 : f32
    %44 = vector.broadcast %cst_34 : f32 to vector<16x128xf32>
    %45 = arith.addf %44, %43 : vector<16x128xf32>
    %46 = arith.divf %44, %45 : vector<16x128xf32>
    %c0_35 = arith.constant 0 : index
    %c0_36 = arith.constant 0 : index
    %47 = vector.load %arg12[%c0_35, %c0_36] : memref<16x128xf32, #tpu.memory_space<vmem>>, vector<16x128xf32>
    tpu.vector_store %arg12[%c0_35, %c0_36], %46 {strides = array<i32>} : memref<16x128xf32, #tpu.memory_space<vmem>>, vector<16x128xf32>,
    return
  }
}

</mosaic_0001>

<llo_original>
// kernel: gcn_model_forward.1
$region0: #{gcn_model_forward.1}
  #allocation0 [shape = 'u32[]', space=smem, size = 0x4, offset = 0x4, fixed_abs, tag = 'smem constant byte address 0x4 - core index']
  #allocation1 [shape = 'u32[72,128]{1,0:T(1,128)}', space=vmem, size = 0x9000, scoped, tag = 'internal scratch']
  %s0 = inlined_call_operand.vmem [shape: f32[16,16], index: 0, kind: input, shape index: {}]
  %s1 = inlined_call_operand.vmem [shape: bf16[16,128], index: 1, kind: input, shape index: {}]
  %s2 = inlined_call_operand.hbm [shape: bf16[128,128], index: 2, kind: input, shape index: {}]
  %s3 = inlined_call_operand.vmem [shape: f32[1,128], index: 3, kind: input, shape index: {}]
  %s4 = inlined_call_operand.hbm [shape: bf16[128,128], index: 4, kind: input, shape index: {}]
  %s5 = inlined_call_operand.vmem [shape: f32[1,128], index: 5, kind: input, shape index: {}]
  %s6 = inlined_call_operand.hbm [shape: bf16[128,128], index: 6, kind: input, shape index: {}]
  %s7 = inlined_call_operand.vmem [shape: f32[1,128], index: 7, kind: input, shape index: {}]
  %s8 = inlined_call_operand.hbm [shape: bf16[128,1024], index: 8, kind: input, shape index: {}]
  %s9 = inlined_call_operand.vmem [shape: f32[1,1024], index: 9, kind: input, shape index: {}]
  %s10 = inlined_call_operand.hbm [shape: bf16[1024,128], index: 10, kind: input, shape index: {}]
  %s11 = inlined_call_operand.vmem [shape: f32[1,128], index: 11, kind: input, shape index: {}]
  %s12 = inlined_call_operand.vmem [shape: f32[16,128], index: 12, kind: output, shape index: {}]
  %s13 = sld [smem:[#allocation0]]
  $region78: #{gcn_model_forward.1} parent=0
    _
  %s15 = ssub.s32 1, %s13
  %s16 = scalar_select 0, %s15, %s13
  $region1: #{gcn_model_forward.1} parent=0
    #allocation2 [shape = 'u8[32768]{0}', space=vmem, size = 0x8000, scoped, tag = 'input window, operand 2, single buffered']
    #allocation3 [shape = 's32[1]{0}', space=sflag, size = 0x4, scoped, tag = 'scoped memory for gcn_model_forward.1']
    #allocation4 [shape = 'u8[32768]{0}', space=vmem, size = 0x8000, scoped, tag = 'input window, operand 4, single buffered']
    #allocation5 [shape = 's32[1]{0}', space=sflag, size = 0x4, scoped, tag = 'scoped memory for gcn_model_forward.1']
    #allocation6 [shape = 'u8[32768]{0}', space=vmem, size = 0x8000, scoped, tag = 'input window, operand 6, single buffered']
    #allocation7 [shape = 'u8[262144]{0}', space=vmem, size = 0x40000, scoped, tag = 'input window, operand 8, single buffered']
    #allocation8 [shape = 's32[1]{0}', space=sflag, size = 0x4, scoped, tag = 'scoped memory for gcn_model_forward.1']
    #allocation9 [shape = 'u8[262144]{0}', space=vmem, size = 0x40000, scoped, tag = 'input window, operand 10, single buffered']
    %17 = vsyncpa [#allocation3], 0
    %18 = vsyncpa [#allocation5], 0
    %19 = vsyncpa [#allocation8], 0
    // Predicated region
    $region2: #{gcn_model_forward.1} parent=1 // pred_check
      _
    $region3: #{gcn_model_forward.1} parent=1 // pred_check_branch
      %21 = sbr.rel (0) target = $region5
    $region4: #{gcn_model_forward.1} parent=1 // pred_region
      _
    $region5: #{gcn_model_forward.1} parent=1 // pred_fallthru
      _
    // Predicated region
    $region6: #{gcn_model_forward.1} parent=1 // pred_check
      _
    $region7: #{gcn_model_forward.1} parent=1 // pred_check_branch
      %23 = sbr.rel (0) target = $region9
    $region8: #{gcn_model_forward.1} parent=1 // pred_region
      _
    $region9: #{gcn_model_forward.1} parent=1 // pred_fallthru
      _
    // Predicated region
    $region10: #{gcn_model_forward.1} parent=1 // pred_check
      _
    $region11: #{gcn_model_forward.1} parent=1 // pred_check_branch
      %25 = sbr.rel (0) target = $region13
    $region12: #{gcn_model_forward.1} parent=1 // pred_region
      %27 = vsyncadd [#allocation3], 0
      %s28 = sshll.u32 %s2, 4
      %s29 = int_to_ptr.hbm [resolvable:$true] %s28
      %s30 = sshll.u32 [#allocation2], 4
      %s31 = int_to_ptr.vmem [resolvable:$true] %s30
      %36 = dma.hbm_to_vmem [thread:$0]  %s29, 1024, %s31, [#allocation3], 64, 64, 4
    $region13: #{gcn_model_forward.1} parent=1 // pred_fallthru
      _
    // Predicated region
    $region14: #{gcn_model_forward.1} parent=1 // pred_check
      _
    $region15: #{gcn_model_forward.1} parent=1 // pred_check_branch
      %38 = sbr.rel (0) target = $region17
    $region16: #{gcn_model_forward.1} parent=1 // pred_region
      _
    $region17: #{gcn_model_forward.1} parent=1 // pred_fallthru
      _
    // Predicated region
    $region18: #{gcn_model_forward.1} parent=1 // pred_check
      _
    $region19: #{gcn_model_forward.1} parent=1 // pred_check_branch
      %40 = sbr.rel (0) target = $region21
    $region20: #{gcn_model_forward.1} parent=1 // pred_region
      %42 = vsyncadd [#allocation5], 0
      %s43 = sshll.u32 %s4, 4
      %s44 = int_to_ptr.hbm [resolvable:$true] %s43
      %s45 = sshll.u32 [#allocation4], 4
      %s46 = int_to_ptr.vmem [resolvable:$true] %s45
      %51 = dma.hbm_to_vmem [thread:$0]  %s44, 1024, %s46, [#allocation5], 64, 64, 4
    $region21: #{gcn_model_forward.1} parent=1 // pred_fallthru
      _
    // Predicated region
    $region22: #{gcn_model_forward.1} parent=1 // pred_check
      _
    $region23: #{gcn_model_forward.1} parent=1 // pred_check_branch
      %53 = sbr.rel (0) target = $region25
    $region24: #{gcn_model_forward.1} parent=1 // pred_region
      _
    $region25: #{gcn_model_forward.1} parent=1 // pred_fallthru
      _
    // Predicated region
    $region26: #{gcn_model_forward.1} parent=1 // pred_check
      _
    $region27: #{gcn_model_forward.1} parent=1 // pred_check_branch
      %55 = sbr.rel (0) target = $region29
    $region28: #{gcn_model_forward.1} parent=1 // pred_region
      %57 = vsyncadd [#allocation5], 0
      %s58 = sshll.u32 %s6, 4
      %s59 = int_to_ptr.hbm [resolvable:$true] %s58
      %s60 = sshll.u32 [#allocation6], 4
      %s61 = int_to_ptr.vmem [resolvable:$true] %s60
      %66 = dma.hbm_to_vmem [thread:$0]  %s59, 1024, %s61, [#allocation5], 64, 64, 4
    $region29: #{gcn_model_forward.1} parent=1 // pred_fallthru
      _
    // Predicated region
    $region30: #{gcn_model_forward.1} parent=1 // pred_check
      _
    $region31: #{gcn_model_forward.1} parent=1 // pred_check_branch
      %68 = sbr.rel (0) target = $region33
    $region32: #{gcn_model_forward.1} parent=1 // pred_region
      _
    $region33: #{gcn_model_forward.1} parent=1 // pred_fallthru
      _
    // Predicated region
    $region34: #{gcn_model_forward.1} parent=1 // pred_check
      _
    $region35: #{gcn_model_forward.1} parent=1 // pred_check_branch
      %70 = sbr.rel (0) target = $region37
    $region36: #{gcn_model_forward.1} parent=1 // pred_region
      %72 = vsyncadd [#allocation8], 0
      %s73 = sshll.u32 %s8, 4
      %s74 = int_to_ptr.hbm [resolvable:$true] %s73
      %s75 = sshll.u32 [#allocation7], 4
      %s76 = int_to_ptr.vmem [resolvable:$true] %s75
      %81 = dma.hbm_to_vmem [thread:$0]  %s74, 8192, %s76, [#allocation8], 512, 512, 32
    $region37: #{gcn_model_forward.1} parent=1 // pred_fallthru
      _
    // Predicated region
    $region38: #{gcn_model_forward.1} parent=1 // pred_check
      _
    $region39: #{gcn_model_forward.1} parent=1 // pred_check_branch
      %83 = sbr.rel (0) target = $region41
    $region40: #{gcn_model_forward.1} parent=1 // pred_region
      _
    $region41: #{gcn_model_forward.1} parent=1 // pred_fallthru
      _
    // Predicated region
    $region42: #{gcn_model_forward.1} parent=1 // pred_check
      _
    $region43: #{gcn_model_forward.1} parent=1 // pred_check_branch
      %85 = sbr.rel (0) target = $region45
    $region44: #{gcn_model_forward.1} parent=1 // pred_region
      %87 = vsyncadd [#allocation8], 0
      %s88 = sshll.u32 %s10, 4
      %s89 = int_to_ptr.hbm [resolvable:$true] %s88
      %s90 = sshll.u32 [#allocation9], 4
      %s91 = int_to_ptr.vmem [resolvable:$true] %s90
      %96 = dma.hbm_to_vmem [thread:$0]  %s89, 8192, %s91, [#allocation8], 64, 64, 4
    $region45: #{gcn_model_forward.1} parent=1 // pred_fallthru
      _
    // Predicated region
    $region46: #{gcn_model_forward.1} parent=1 // pred_check
      _
    $region47: #{gcn_model_forward.1} parent=1 // pred_check_branch
      %98 = sbr.rel (0) target = $region49
    $region48: #{gcn_model_forward.1} parent=1 // pred_region
      _
    $region49: #{gcn_model_forward.1} parent=1 // pred_fallthru
      _
    // Predicated region
    $region50: #{gcn_model_forward.1} parent=1 // pred_check
      _
    $region51: #{gcn_model_forward.1} parent=1 // pred_check_branch
      %100 = sbr.rel (0) target = $region53
    $region52: #{gcn_model_forward.1} parent=1 // pred_region
      %102 = dma.done [#allocation3], 1024
    $region53: #{gcn_model_forward.1} parent=1 // pred_fallthru
      _
    // Predicated region
    $region54: #{gcn_model_forward.1} parent=1 // pred_check
      _
    $region55: #{gcn_model_forward.1} parent=1 // pred_check_branch
      %104 = sbr.rel (0) target = $region57
    $region56: #{gcn_model_forward.1} parent=1 // pred_region
      %106 = dma.done [#allocation5], 1024
    $region57: #{gcn_model_forward.1} parent=1 // pred_fallthru
      _
    // Predicated region
    $region58: #{gcn_model_forward.1} parent=1 // pred_check
      _
    $region59: #{gcn_model_forward.1} parent=1 // pred_check_branch
      %108 = sbr.rel (0) target = $region61
    $region60: #{gcn_model_forward.1} parent=1 // pred_region
      %110 = dma.done [#allocation5], 1024
    $region61: #{gcn_model_forward.1} parent=1 // pred_fallthru
      _
    // Predicated region
    $region62: #{gcn_model_forward.1} parent=1 // pred_check
      _
    $region63: #{gcn_model_forward.1} parent=1 // pred_check_branch
      %112 = sbr.rel (0) target = $region65
    $region64: #{gcn_model_forward.1} parent=1 // pred_region
      %114 = dma.done [#allocation8], 8192
    $region65: #{gcn_model_forward.1} parent=1 // pred_fallthru
      _
    // Predicated region
    $region66: #{gcn_model_forward.1} parent=1 // pred_check
      _
    $region67: #{gcn_model_forward.1} parent=1 // pred_check_branch
      %116 = sbr.rel (0) target = $region69
    $region68: #{gcn_model_forward.1} parent=1 // pred_region
      %118 = dma.done [#allocation8], 8192
    $region69: #{gcn_model_forward.1} parent=1 // pred_fallthru
      _
    %v119 = vld [vmem:[%s0] sm:$0xff]
    %v120 = vld [vmem:[%s0 + $0x8] sm:$0xff]
    %v121 = vld [vmem:[%s1] sm:$0xf]
    %v122 = vld [vmem:[%s1 + $0x4] sm:$0xf]
    %v123 = vld [vmem:[#allocation2] sm:$0xf]
    %v124 = vld [vmem:[#allocation2 + $0x4] sm:$0xf]
    %v125 = vld [vmem:[#allocation2 + $0x8] sm:$0xf]
    %v126 = vld [vmem:[#allocation2 + $0xc] sm:$0xf]
    %v127 = vld [vmem:[#allocation2 + $0x10] sm:$0xf]
    %v128 = vld [vmem:[#allocation2 + $0x14] sm:$0xf]
    %v129 = vld [vmem:[#allocation2 + $0x18] sm:$0xf]
    %v130 = vld [vmem:[#allocation2 + $0x1c] sm:$0xf]
    %v131 = vld [vmem:[#allocation2 + $0x20] sm:$0xf]
    %v132 = vld [vmem:[#allocation2 + $0x24] sm:$0xf]
    %v133 = vld [vmem:[#allocation2 + $0x28] sm:$0xf]
    %v134 = vld [vmem:[#allocation2 + $0x2c] sm:$0xf]
    %v135 = vld [vmem:[#allocation2 + $0x30] sm:$0xf]
    %v136 = vld [vmem:[#allocation2 + $0x34] sm:$0xf]
    %v137 = vld [vmem:[#allocation2 + $0x38] sm:$0xf]
    %v138 = vld [vmem:[#allocation2 + $0x3c] sm:$0xf]
    %v141 = vunpack.c.l.b16 %v121
    %v142 = vunpack.c.l.b16 %v122
    %v143 = vpack.c.b16 %v142, %v141
    %v161 = vunpack.c.l.b16 %v123
    %v162 = vunpack.c.l.b16 %v124
    %v163 = vunpack.c.l.b16 %v125
    %v164 = vunpack.c.l.b16 %v126
    %v165 = vunpack.c.l.b16 %v127
    %v166 = vunpack.c.l.b16 %v128
    %v167 = vunpack.c.l.b16 %v129
    %v168 = vunpack.c.l.b16 %v130
    %v169 = vunpack.c.l.b16 %v131
    %v170 = vunpack.c.l.b16 %v132
    %v171 = vunpack.c.l.b16 %v133
    %v172 = vunpack.c.l.b16 %v134
    %v173 = vunpack.c.l.b16 %v135
    %v174 = vunpack.c.l.b16 %v136
    %v175 = vunpack.c.l.b16 %v137
    %v176 = vunpack.c.l.b16 %v138
    %v177 = vpack.c.b16 %v162, %v161
    %v178 = vpack.c.b16 %v164, %v163
    %v179 = vpack.c.b16 %v166, %v165
    %v180 = vpack.c.b16 %v168, %v167
    %v181 = vpack.c.b16 %v170, %v169
    %v182 = vpack.c.b16 %v172, %v171
    %v183 = vpack.c.b16 %v174, %v173
    %v184 = vpack.c.b16 %v176, %v175
    %193 = vmatpush.bf16.msra.mxu0 %v184
    %194 = vmatpush.bf16.msra.mxu0 %v183
    %195 = vmatpush.bf16.msra.mxu0 %v182
    %196 = vmatpush.bf16.msra.mxu0 %v181
    %197 = vmatpush.bf16.msra.mxu0 %v180
    %198 = vmatpush.bf16.msra.mxu0 %v179
    %199 = vmatpush.bf16.msra.mxu0 %v178
    %200 = vmatpush.bf16.msra.mxu0 %v177
    %201 = vmatmul.bf16.gmra.mxu0 %v143
    %v202 = vpop.f32.mrf.mxu0
    %v203 = vadd.f32 0.0, %v202
    %v204 = vpop.f32.mrf.mxu0
    %v205 = vadd.f32 0.0, %v204
    %206 = vdwg.mxu0
    %v207 = vld [vmem:[%s3] sm:$0x1]
    %v209 = vperm.slane %v207, 0
    %vm211 = vcmask 130048
    %v213 = vsel %vm211, %v119, 0
    %v216 = vsel %vm211, %v120, 0
    %218 = vmatpush.msra.mxu0 0.0
    %219 = vmatpush.msra.mxu0 0.0
    %220 = vmatpush.msra.mxu0 0.0
    %221 = vmatpush.msra.mxu0 0.0
    %222 = vmatpush.msra.mxu0 0.0
    %223 = vmatpush.msra.mxu0 0.0
    %224 = vmatpush.msra.mxu0 0.0
    %225 = vmatpush.msra.mxu0 0.0
    %226 = vmatpush.msra.mxu0 0.0
    %227 = vmatpush.msra.mxu0 0.0
    %228 = vmatpush.msra.mxu0 0.0
    %229 = vmatpush.msra.mxu0 0.0
    %230 = vmatpush.msra.mxu0 0.0
    %231 = vmatpush.msra.mxu0 0.0
    %232 = vmatpush.msra.mxu0 %v205
    %233 = vmatpush.msra.mxu0 %v203
    %234 = vmatmul.f32.gmra.mxu0 %v213
    %v235 = vpop.f32.mrf.mxu0
    %v236 = vadd.f32 %v209, %v235
    %237 = vmatmul.f32.gmra.mxu0 %v216
    %v238 = vpop.f32.mrf.mxu0
    %v239 = vadd.f32 %v209, %v238
    %240 = vdwg.mxu0
    %v241 = vmax.f32 %v236, 0.0
    %v242 = vmax.f32 %v239, 0.0
    %v243 = vpack.c.bf16 %v242, %v241
    %v244 = vld [vmem:[#allocation4] sm:$0xf]
    %v245 = vld [vmem:[#allocation4 + $0x4] sm:$0xf]
    %v246 = vld [vmem:[#allocation4 + $0x8] sm:$0xf]
    %v247 = vld [vmem:[#allocation4 + $0xc] sm:$0xf]
    %v248 = vld [vmem:[#allocation4 + $0x10] sm:$0xf]
    %v249 = vld [vmem:[#allocation4 + $0x14] sm:$0xf]
    %v250 = vld [vmem:[#allocation4 + $0x18] sm:$0xf]
    %v251 = vld [vmem:[#allocation4 + $0x1c] sm:$0xf]
    %v252 = vld [vmem:[#allocation4 + $0x20] sm:$0xf]
    %v253 = vld [vmem:[#allocation4 + $0x24] sm:$0xf]
    %v254 = vld [vmem:[#allocation4 + $0x28] sm:$0xf]
    %v255 = vld [vmem:[#allocation4 + $0x2c] sm:$0xf]
    %v256 = vld [vmem:[#allocation4 + $0x30] sm:$0xf]
    %v257 = vld [vmem:[#allocation4 + $0x34] sm:$0xf]
    %v258 = vld [vmem:[#allocation4 + $0x38] sm:$0xf]
    %v259 = vld [vmem:[#allocation4 + $0x3c] sm:$0xf]
    %v276 = vunpack.c.l.b16 %v244
    %v277 = vunpack.c.l.b16 %v245
    %v278 = vunpack.c.l.b16 %v246
    %v279 = vunpack.c.l.b16 %v247
    %v280 = vunpack.c.l.b16 %v248
    %v281 = vunpack.c.l.b16 %v249
    %v282 = vunpack.c.l.b16 %v250
    %v283 = vunpack.c.l.b16 %v251
    %v284 = vunpack.c.l.b16 %v252
    %v285 = vunpack.c.l.b16 %v253
    %v286 = vunpack.c.l.b16 %v254
    %v287 = vunpack.c.l.b16 %v255
    %v288 = vunpack.c.l.b16 %v256
    %v289 = vunpack.c.l.b16 %v257
    %v290 = vunpack.c.l.b16 %v258
    %v291 = vunpack.c.l.b16 %v259
    %v292 = vpack.c.b16 %v277, %v276
    %v293 = vpack.c.b16 %v279, %v278
    %v294 = vpack.c.b16 %v281, %v280
    %v295 = vpack.c.b16 %v283, %v282
    %v296 = vpack.c.b16 %v285, %v284
    %v297 = vpack.c.b16 %v287, %v286
    %v298 = vpack.c.b16 %v289, %v288
    %v299 = vpack.c.b16 %v291, %v290
    %308 = vmatpush.bf16.msra.mxu0 %v299
    %309 = vmatpush.bf16.msra.mxu0 %v298
    %310 = vmatpush.bf16.msra.mxu0 %v297
    %311 = vmatpush.bf16.msra.mxu0 %v296
    %312 = vmatpush.bf16.msra.mxu0 %v295
    %313 = vmatpush.bf16.msra.mxu0 %v294
    %314 = vmatpush.bf16.msra.mxu0 %v293
    %315 = vmatpush.bf16.msra.mxu0 %v292
    %316 = vmatmul.bf16.gmra.mxu0 %v243
    %v317 = vpop.f32.mrf.mxu0
    %v318 = vadd.f32 0.0, %v317
    %v319 = vpop.f32.mrf.mxu0
    %v320 = vadd.f32 0.0, %v319
    %321 = vdwg.mxu0
    %v322 = vld [vmem:[%s5] sm:$0x1]
    %v324 = vperm.slane %v322, 0
    %326 = vmatpush.msra.mxu0 0.0
    %327 = vmatpush.msra.mxu0 0.0
    %328 = vmatpush.msra.mxu0 0.0
    %329 = vmatpush.msra.mxu0 0.0
    %330 = vmatpush.msra.mxu0 0.0
    %331 = vmatpush.msra.mxu0 0.0
    %332 = vmatpush.msra.mxu0 0.0
    %333 = vmatpush.msra.mxu0 0.0
    %334 = vmatpush.msra.mxu0 0.0
    %335 = vmatpush.msra.mxu0 0.0
    %336 = vmatpush.msra.mxu0 0.0
    %337 = vmatpush.msra.mxu0 0.0
    %338 = vmatpush.msra.mxu0 0.0
    %339 = vmatpush.msra.mxu0 0.0
    %340 = vmatpush.msra.mxu0 %v320
    %341 = vmatpush.msra.mxu0 %v318
    %342 = vmatmul.f32.gmra.mxu0 %v213
    %v343 = vpop.f32.mrf.mxu0
    %v344 = vadd.f32 %v324, %v343
    %345 = vmatmul.f32.gmra.mxu0 %v216
    %v346 = vpop.f32.mrf.mxu0
    %v347 = vadd.f32 %v324, %v346
    %348 = vdwg.mxu0
    %v349 = vmax.f32 %v344, 0.0
    %v350 = vmax.f32 %v347, 0.0
    %v351 = vpack.c.bf16 %v350, %v349
    %v352 = vld [vmem:[#allocation6] sm:$0xf]
    %v353 = vld [vmem:[#allocation6 + $0x4] sm:$0xf]
    %v354 = vld [vmem:[#allocation6 + $0x8] sm:$0xf]
    %v355 = vld [vmem:[#allocation6 + $0xc] sm:$0xf]
    %v356 = vld [vmem:[#allocation6 + $0x10] sm:$0xf]
    %v357 = vld [vmem:[#allocation6 + $0x14] sm:$0xf]
    %v358 = vld [vmem:[#allocation6 + $0x18] sm:$0xf]
    %v359 = vld [vmem:[#allocation6 + $0x1c] sm:$0xf]
    %v360 = vld [vmem:[#allocation6 + $0x20] sm:$0xf]
    %v361 = vld [vmem:[#allocation6 + $0x24] sm:$0xf]
    %v362 = vld [vmem:[#allocation6 + $0x28] sm:$0xf]
    %v363 = vld [vmem:[#allocation6 + $0x2c] sm:$0xf]
    %v364 = vld [vmem:[#allocation6 + $0x30] sm:$0xf]
    %v365 = vld [vmem:[#allocation6 + $0x34] sm:$0xf]
    %v366 = vld [vmem:[#allocation6 + $0x38] sm:$0xf]
    %v367 = vld [vmem:[#allocation6 + $0x3c] sm:$0xf]
    %v384 = vunpack.c.l.b16 %v352
    %v385 = vunpack.c.l.b16 %v353
    %v386 = vunpack.c.l.b16 %v354
    %v387 = vunpack.c.l.b16 %v355
    %v388 = vunpack.c.l.b16 %v356
    %v389 = vunpack.c.l.b16 %v357
    %v390 = vunpack.c.l.b16 %v358
    %v391 = vunpack.c.l.b16 %v359
    %v392 = vunpack.c.l.b16 %v360
    %v393 = vunpack.c.l.b16 %v361
    %v394 = vunpack.c.l.b16 %v362
    %v395 = vunpack.c.l.b16 %v363
    %v396 = vunpack.c.l.b16 %v364
    %v397 = vunpack.c.l.b16 %v365
    %v398 = vunpack.c.l.b16 %v366
    %v399 = vunpack.c.l.b16 %v367
    %v400 = vpack.c.b16 %v385, %v384
    %v401 = vpack.c.b16 %v387, %v386
    %v402 = vpack.c.b16 %v389, %v388
    %v403 = vpack.c.b16 %v391, %v390
    %v404 = vpack.c.b16 %v393, %v392
    %v405 = vpack.c.b16 %v395, %v394
    %v406 = vpack.c.b16 %v397, %v396
    %v407 = vpack.c.b16 %v399, %v398
    %416 = vmatpush.bf16.msra.mxu0 %v407
    %417 = vmatpush.bf16.msra.mxu0 %v406
    %418 = vmatpush.bf16.msra.mxu0 %v405
    %419 = vmatpush.bf16.msra.mxu0 %v404
    %420 = vmatpush.bf16.msra.mxu0 %v403
    %421 = vmatpush.bf16.msra.mxu0 %v402
    %422 = vmatpush.bf16.msra.mxu0 %v401
    %423 = vmatpush.bf16.msra.mxu0 %v400
    %424 = vmatmul.bf16.gmra.mxu0 %v351
    %v425 = vpop.f32.mrf.mxu0
    %v426 = vadd.f32 0.0, %v425
    %v427 = vpop.f32.mrf.mxu0
    %v428 = vadd.f32 0.0, %v427
    %429 = vdwg.mxu0
    %v430 = vld [vmem:[%s7] sm:$0x1]
    %v432 = vperm.slane %v430, 0
    %434 = vmatpush.msra.mxu0 0.0
    %435 = vmatpush.msra.mxu0 0.0
    %436 = vmatpush.msra.mxu0 0.0
    %437 = vmatpush.msra.mxu0 0.0
    %438 = vmatpush.msra.mxu0 0.0
    %439 = vmatpush.msra.mxu0 0.0
    %440 = vmatpush.msra.mxu0 0.0
    %441 = vmatpush.msra.mxu0 0.0
    %442 = vmatpush.msra.mxu0 0.0
    %443 = vmatpush.msra.mxu0 0.0
    %444 = vmatpush.msra.mxu0 0.0
    %445 = vmatpush.msra.mxu0 0.0
    %446 = vmatpush.msra.mxu0 0.0
    %447 = vmatpush.msra.mxu0 0.0
    %448 = vmatpush.msra.mxu0 %v428
    %449 = vmatpush.msra.mxu0 %v426
    %450 = vmatmul.f32.gmra.mxu0 %v213
    %v451 = vpop.f32.mrf.mxu0
    %v452 = vadd.f32 %v432, %v451
    %453 = vmatmul.f32.gmra.mxu0 %v216
    %v454 = vpop.f32.mrf.mxu0
    %v455 = vadd.f32 %v432, %v454
    %456 = vdwg.mxu0
    %v457 = vmax.f32 %v452, 0.0
    %v458 = vmax.f32 %v455, 0.0
    %v459 = vpack.c.bf16 %v458, %v457
    %v460 = vld [vmem:[#allocation7] sm:$0xff]
    %v461 = vld [vmem:[#allocation7 + $0x8] sm:$0xff]
    %v462 = vld [vmem:[#allocation7 + $0x10] sm:$0xff]
    %v463 = vld [vmem:[#allocation7 + $0x18] sm:$0xff]
    %v464 = vld [vmem:[#allocation7 + $0x20] sm:$0xff]
    %v465 = vld [vmem:[#allocation7 + $0x28] sm:$0xff]
    %v466 = vld [vmem:[#allocation7 + $0x30] sm:$0xff]
    %v467 = vld [vmem:[#allocation7 + $0x38] sm:$0xff]
    %v468 = vld [vmem:[#allocation7 + $0x40] sm:$0xff]
    %v469 = vld [vmem:[#allocation7 + $0x48] sm:$0xff]
    %v470 = vld [vmem:[#allocation7 + $0x50] sm:$0xff]
    %v471 = vld [vmem:[#allocation7 + $0x58] sm:$0xff]
    %v472 = vld [vmem:[#allocation7 + $0x60] sm:$0xff]
    %v473 = vld [vmem:[#allocation7 + $0x68] sm:$0xff]
    %v474 = vld [vmem:[#allocation7 + $0x70] sm:$0xff]
    %v475 = vld [vmem:[#allocation7 + $0x78] sm:$0xff]
    %v476 = vld [vmem:[#allocation7 + $0x80] sm:$0xff]
    %v477 = vld [vmem:[#allocation7 + $0x88] sm:$0xff]
    %v478 = vld [vmem:[#allocation7 + $0x90] sm:$0xff]
    %v479 = vld [vmem:[#allocation7 + $0x98] sm:$0xff]
    %v480 = vld [vmem:[#allocation7 + $0xa0] sm:$0xff]
    %v481 = vld [vmem:[#allocation7 + $0xa8] sm:$0xff]
    %v482 = vld [vmem:[#allocation7 + $0xb0] sm:$0xff]
    %v483 = vld [vmem:[#allocation7 + $0xb8] sm:$0xff]
    %v484 = vld [vmem:[#allocation7 + $0xc0] sm:$0xff]
    %v485 = vld [vmem:[#allocation7 + $0xc8] sm:$0xff]
    %v486 = vld [vmem:[#allocation7 + $0xd0] sm:$0xff]
    %v487 = vld [vmem:[#allocation7 + $0xd8] sm:$0xff]
    %v488 = vld [vmem:[#allocation7 + $0xe0] sm:$0xff]
    %v489 = vld [vmem:[#allocation7 + $0xe8] sm:$0xff]
    %v490 = vld [vmem:[#allocation7 + $0xf0] sm:$0xff]
    %v491 = vld [vmem:[#allocation7 + $0xf8] sm:$0xff]
    %v492 = vld [vmem:[#allocation7 + $0x100] sm:$0xff]
    %v493 = vld [vmem:[#allocation7 + $0x108] sm:$0xff]
    %v494 = vld [vmem:[#allocation7 + $0x110] sm:$0xff]
    %v495 = vld [vmem:[#allocation7 + $0x118] sm:$0xff]
    %v496 = vld [vmem:[#allocation7 + $0x120] sm:$0xff]
    %v497 = vld [vmem:[#allocation7 + $0x128] sm:$0xff]
    %v498 = vld [vmem:[#allocation7 + $0x130] sm:$0xff]
    %v499 = vld [vmem:[#allocation7 + $0x138] sm:$0xff]
    %v500 = vld [vmem:[#allocation7 + $0x140] sm:$0xff]
    %v501 = vld [vmem:[#allocation7 + $0x148] sm:$0xff]
    %v502 = vld [vmem:[#allocation7 + $0x150] sm:$0xff]
    %v503 = vld [vmem:[#allocation7 + $0x158] sm:$0xff]
    %v504 = vld [vmem:[#allocation7 + $0x160] sm:$0xff]
    %v505 = vld [vmem:[#allocation7 + $0x168] sm:$0xff]
    %v506 = vld [vmem:[#allocation7 + $0x170] sm:$0xff]
    %v507 = vld [vmem:[#allocation7 + $0x178] sm:$0xff]
    %v508 = vld [vmem:[#allocation7 + $0x180] sm:$0xff]
    %v509 = vld [vmem:[#allocation7 + $0x188] sm:$0xff]
    %v510 = vld [vmem:[#allocation7 + $0x190] sm:$0xff]
    %v511 = vld [vmem:[#allocation7 + $0x198] sm:$0xff]
    %v512 = vld [vmem:[#allocation7 + $0x1a0] sm:$0xff]
    %v513 = vld [vmem:[#allocation7 + $0x1a8] sm:$0xff]
    %v514 = vld [vmem:[#allocation7 + $0x1b0] sm:$0xff]
    %v515 = vld [vmem:[#allocation7 + $0x1b8] sm:$0xff]
    %v516 = vld [vmem:[#allocation7 + $0x1c0] sm:$0xff]
    %v517 = vld [vmem:[#allocation7 + $0x1c8] sm:$0xff]
    %v518 = vld [vmem:[#allocation7 + $0x1d0] sm:$0xff]
    %v519 = vld [vmem:[#allocation7 + $0x1d8] sm:$0xff]
    %v520 = vld [vmem:[#allocation7 + $0x1e0] sm:$0xff]
    %v521 = vld [vmem:[#allocation7 + $0x1e8] sm:$0xff]
    %v522 = vld [vmem:[#allocation7 + $0x1f0] sm:$0xff]
    %v523 = vld [vmem:[#allocation7 + $0x1f8] sm:$0xff]
    %v524 = vld [vmem:[%s9] sm:$0xff]
    %v526 = vperm.slane %v524, 0
    %v527 = vperm.slane %v524, 1
    %v528 = vperm.slane %v524, 2
    %v529 = vperm.slane %v524, 3
    %v530 = vperm.slane %v524, 4
    %v531 = vperm.slane %v524, 5
    %v532 = vperm.slane %v524, 6
    %v533 = vperm.slane %v524, 7
    %v606 = vunpack.c.l.b16 %v460
    %v607 = vunpack.c.h.b16 %v460
    %v608 = vunpack.c.l.b16 %v461
    %v609 = vunpack.c.h.b16 %v461
    %v610 = vunpack.c.l.b16 %v462
    %v611 = vunpack.c.h.b16 %v462
    %v612 = vunpack.c.l.b16 %v463
    %v613 = vunpack.c.h.b16 %v463
    %v614 = vunpack.c.l.b16 %v464
    %v615 = vunpack.c.h.b16 %v464
    %v616 = vunpack.c.l.b16 %v465
    %v617 = vunpack.c.h.b16 %v465
    %v618 = vunpack.c.l.b16 %v466
    %v619 = vunpack.c.h.b16 %v466
    %v620 = vunpack.c.l.b16 %v467
    %v621 = vunpack.c.h.b16 %v467
    %v622 = vunpack.c.l.b16 %v468
    %v623 = vunpack.c.h.b16 %v468
    %v624 = vunpack.c.l.b16 %v469
    %v625 = vunpack.c.h.b16 %v469
    %v626 = vunpack.c.l.b16 %v470
    %v627 = vunpack.c.h.b16 %v470
    %v628 = vunpack.c.l.b16 %v471
    %v629 = vunpack.c.h.b16 %v471
    %v630 = vunpack.c.l.b16 %v472
    %v631 = vunpack.c.h.b16 %v472
    %v632 = vunpack.c.l.b16 %v473
    %v633 = vunpack.c.h.b16 %v473
    %v634 = vunpack.c.l.b16 %v474
    %v635 = vunpack.c.h.b16 %v474
    %v636 = vunpack.c.l.b16 %v475
    %v637 = vunpack.c.h.b16 %v475
    %v638 = vunpack.c.l.b16 %v476
    %v639 = vunpack.c.h.b16 %v476
    %v640 = vunpack.c.l.b16 %v477
    %v641 = vunpack.c.h.b16 %v477
    %v642 = vunpack.c.l.b16 %v478
    %v643 = vunpack.c.h.b16 %v478
    %v644 = vunpack.c.l.b16 %v479
    %v645 = vunpack.c.h.b16 %v479
    %v646 = vunpack.c.l.b16 %v480
    %v647 = vunpack.c.h.b16 %v480
    %v648 = vunpack.c.l.b16 %v481
    %v649 = vunpack.c.h.b16 %v481
    %v650 = vunpack.c.l.b16 %v482
    %v651 = vunpack.c.h.b16 %v482
    %v652 = vunpack.c.l.b16 %v483
    %v653 = vunpack.c.h.b16 %v483
    %v654 = vunpack.c.l.b16 %v484
    %v655 = vunpack.c.h.b16 %v484
    %v656 = vunpack.c.l.b16 %v485
    %v657 = vunpack.c.h.b16 %v485
    %v658 = vunpack.c.l.b16 %v486
    %v659 = vunpack.c.h.b16 %v486
    %v660 = vunpack.c.l.b16 %v487
    %v661 = vunpack.c.h.b16 %v487
    %v662 = vunpack.c.l.b16 %v488
    %v663 = vunpack.c.h.b16 %v488
    %v664 = vunpack.c.l.b16 %v489
    %v665 = vunpack.c.h.b16 %v489
    %v666 = vunpack.c.l.b16 %v490
    %v667 = vunpack.c.h.b16 %v490
    %v668 = vunpack.c.l.b16 %v491
    %v669 = vunpack.c.h.b16 %v491
    %v670 = vunpack.c.l.b16 %v492
    %v671 = vunpack.c.h.b16 %v492
    %v672 = vunpack.c.l.b16 %v493
    %v673 = vunpack.c.h.b16 %v493
    %v674 = vunpack.c.l.b16 %v494
    %v675 = vunpack.c.h.b16 %v494
    %v676 = vunpack.c.l.b16 %v495
    %v677 = vunpack.c.h.b16 %v495
    %v678 = vunpack.c.l.b16 %v496
    %v679 = vunpack.c.h.b16 %v496
    %v680 = vunpack.c.l.b16 %v497
    %v681 = vunpack.c.h.b16 %v497
    %v682 = vunpack.c.l.b16 %v498
    %v683 = vunpack.c.h.b16 %v498
    %v684 = vunpack.c.l.b16 %v499
    %v685 = vunpack.c.h.b16 %v499
    %v686 = vunpack.c.l.b16 %v500
    %v687 = vunpack.c.h.b16 %v500
    %v688 = vunpack.c.l.b16 %v501
    %v689 = vunpack.c.h.b16 %v501
    %v690 = vunpack.c.l.b16 %v502
    %v691 = vunpack.c.h.b16 %v502
    %v692 = vunpack.c.l.b16 %v503
    %v693 = vunpack.c.h.b16 %v503
    %v694 = vunpack.c.l.b16 %v504
    %v695 = vunpack.c.h.b16 %v504
    %v696 = vunpack.c.l.b16 %v505
    %v697 = vunpack.c.h.b16 %v505
    %v698 = vunpack.c.l.b16 %v506
    %v699 = vunpack.c.h.b16 %v506
    %v700 = vunpack.c.l.b16 %v507
    %v701 = vunpack.c.h.b16 %v507
    %v702 = vunpack.c.l.b16 %v508
    %v703 = vunpack.c.h.b16 %v508
    %v704 = vunpack.c.l.b16 %v509
    %v705 = vunpack.c.h.b16 %v509
    %v706 = vunpack.c.l.b16 %v510
    %v707 = vunpack.c.h.b16 %v510
    %v708 = vunpack.c.l.b16 %v511
    %v709 = vunpack.c.h.b16 %v511
    %v710 = vunpack.c.l.b16 %v512
    %v711 = vunpack.c.h.b16 %v512
    %v712 = vunpack.c.l.b16 %v513
    %v713 = vunpack.c.h.b16 %v513
    %v714 = vunpack.c.l.b16 %v514
    %v715 = vunpack.c.h.b16 %v514
    %v716 = vunpack.c.l.b16 %v515
    %v717 = vunpack.c.h.b16 %v515
    %v718 = vunpack.c.l.b16 %v516
    %v719 = vunpack.c.h.b16 %v516
    %v720 = vunpack.c.l.b16 %v517
    %v721 = vunpack.c.h.b16 %v517
    %v722 = vunpack.c.l.b16 %v518
    %v723 = vunpack.c.h.b16 %v518
    %v724 = vunpack.c.l.b16 %v519
    %v725 = vunpack.c.h.b16 %v519
    %v726 = vunpack.c.l.b16 %v520
    %v727 = vunpack.c.h.b16 %v520
    %v728 = vunpack.c.l.b16 %v521
    %v729 = vunpack.c.h.b16 %v521
    %v730 = vunpack.c.l.b16 %v522
    %v731 = vunpack.c.h.b16 %v522
    %v732 = vunpack.c.l.b16 %v523
    %v733 = vunpack.c.h.b16 %v523
    %v734 = vpack.c.b16 %v614, %v606
    %v735 = vpack.c.b16 %v615, %v607
    %v736 = vpack.c.b16 %v616, %v608
    %v737 = vpack.c.b16 %v617, %v609
    %v738 = vpack.c.b16 %v618, %v610
    %v739 = vpack.c.b16 %v619, %v611
    %v740 = vpack.c.b16 %v620, %v612
    %v741 = vpack.c.b16 %v621, %v613
    %v742 = vpack.c.b16 %v630, %v622
    %v743 = vpack.c.b16 %v631, %v623
    %v744 = vpack.c.b16 %v632, %v624
    %v745 = vpack.c.b16 %v633, %v625
    %v746 = vpack.c.b16 %v634, %v626
    %v747 = vpack.c.b16 %v635, %v627
    %v748 = vpack.c.b16 %v636, %v628
    %v749 = vpack.c.b16 %v637, %v629
    %v750 = vpack.c.b16 %v646, %v638
    %v751 = vpack.c.b16 %v647, %v639
    %v752 = vpack.c.b16 %v648, %v640
    %v753 = vpack.c.b16 %v649, %v641
    %v754 = vpack.c.b16 %v650, %v642
    %v755 = vpack.c.b16 %v651, %v643
    %v756 = vpack.c.b16 %v652, %v644
    %v757 = vpack.c.b16 %v653, %v645
    %v758 = vpack.c.b16 %v662, %v654
    %v759 = vpack.c.b16 %v663, %v655
    %v760 = vpack.c.b16 %v664, %v656
    %v761 = vpack.c.b16 %v665, %v657
    %v762 = vpack.c.b16 %v666, %v658
    %v763 = vpack.c.b16 %v667, %v659
    %v764 = vpack.c.b16 %v668, %v660
    %v765 = vpack.c.b16 %v669, %v661
    %v766 = vpack.c.b16 %v678, %v670
    %v767 = vpack.c.b16 %v679, %v671
    %v768 = vpack.c.b16 %v680, %v672
    %v769 = vpack.c.b16 %v681, %v673
    %v770 = vpack.c.b16 %v682, %v674
    %v771 = vpack.c.b16 %v683, %v675
    %v772 = vpack.c.b16 %v684, %v676
    %v773 = vpack.c.b16 %v685, %v677
    %v774 = vpack.c.b16 %v694, %v686
    %v775 = vpack.c.b16 %v695, %v687
    %v776 = vpack.c.b16 %v696, %v688
    %v777 = vpack.c.b16 %v697, %v689
    %v778 = vpack.c.b16 %v698, %v690
    %v779 = vpack.c.b16 %v699, %v691
    %v780 = vpack.c.b16 %v700, %v692
    %v781 = vpack.c.b16 %v701, %v693
    %v782 = vpack.c.b16 %v710, %v702
    %v783 = vpack.c.b16 %v711, %v703
    %v784 = vpack.c.b16 %v712, %v704
    %v785 = vpack.c.b16 %v713, %v705
    %v786 = vpack.c.b16 %v714, %v706
    %v787 = vpack.c.b16 %v715, %v707
    %v788 = vpack.c.b16 %v716, %v708
    %v789 = vpack.c.b16 %v717, %v709
    %v790 = vpack.c.b16 %v726, %v718
    %v791 = vpack.c.b16 %v727, %v719
    %v792 = vpack.c.b16 %v728, %v720
    %v793 = vpack.c.b16 %v729, %v721
    %v794 = vpack.c.b16 %v730, %v722
    %v795 = vpack.c.b16 %v731, %v723
    %v796 = vpack.c.b16 %v732, %v724
    %v797 = vpack.c.b16 %v733, %v725
    %862 = vmatpush.bf16.msra.mxu0 %v790
    %863 = vmatpush.bf16.msra.mxu0 %v782
    %864 = vmatpush.bf16.msra.mxu0 %v774
    %865 = vmatpush.bf16.msra.mxu0 %v766
    %866 = vmatpush.bf16.msra.mxu0 %v758
    %867 = vmatpush.bf16.msra.mxu0 %v750
    %868 = vmatpush.bf16.msra.mxu0 %v742
    %869 = vmatpush.bf16.msra.mxu0 %v734
    %870 = vmatmul.bf16.gmra.mxu0 %v459
    %v871 = vpop.f32.mrf.mxu0
    %v872 = vadd.f32 %v526, %v871
    %v873 = vpop.f32.mrf.mxu0
    %v874 = vadd.f32 %v526, %v873
    %875 = vdwg.mxu0
    %876 = vmatpush.bf16.msra.mxu0 %v791
    %877 = vmatpush.bf16.msra.mxu0 %v783
    %878 = vmatpush.bf16.msra.mxu0 %v775
    %879 = vmatpush.bf16.msra.mxu0 %v767
    %880 = vmatpush.bf16.msra.mxu0 %v759
    %881 = vmatpush.bf16.msra.mxu0 %v751
    %882 = vmatpush.bf16.msra.mxu0 %v743
    %883 = vmatpush.bf16.msra.mxu0 %v735
    %884 = vmatmul.bf16.gmra.mxu0 %v459
    %v885 = vpop.f32.mrf.mxu0
    %v886 = vadd.f32 %v527, %v885
    %v887 = vpop.f32.mrf.mxu0
    %v888 = vadd.f32 %v527, %v887
    %889 = vdwg.mxu0
    %890 = vmatpush.bf16.msra.mxu0 %v792
    %891 = vmatpush.bf16.msra.mxu0 %v784
    %892 = vmatpush.bf16.msra.mxu0 %v776
    %893 = vmatpush.bf16.msra.mxu0 %v768
    %894 = vmatpush.bf16.msra.mxu0 %v760
    %895 = vmatpush.bf16.msra.mxu0 %v752
    %896 = vmatpush.bf16.msra.mxu0 %v744
    %897 = vmatpush.bf16.msra.mxu0 %v736
    %898 = vmatmul.bf16.gmra.mxu0 %v459
    %v899 = vpop.f32.mrf.mxu0
    %v900 = vadd.f32 %v528, %v899
    %v901 = vpop.f32.mrf.mxu0
    %v902 = vadd.f32 %v528, %v901
    %903 = vdwg.mxu0
    %904 = vmatpush.bf16.msra.mxu0 %v793
    %905 = vmatpush.bf16.msra.mxu0 %v785
    %906 = vmatpush.bf16.msra.mxu0 %v777
    %907 = vmatpush.bf16.msra.mxu0 %v769
    %908 = vmatpush.bf16.msra.mxu0 %v761
    %909 = vmatpush.bf16.msra.mxu0 %v753
    %910 = vmatpush.bf16.msra.mxu0 %v745
    %911 = vmatpush.bf16.msra.mxu0 %v737
    %912 = vmatmul.bf16.gmra.mxu0 %v459
    %v913 = vpop.f32.mrf.mxu0
    %v914 = vadd.f32 %v529, %v913
    %v915 = vpop.f32.mrf.mxu0
    %v916 = vadd.f32 %v529, %v915
    %917 = vdwg.mxu0
    %918 = vmatpush.bf16.msra.mxu0 %v794
    %919 = vmatpush.bf16.msra.mxu0 %v786
    %920 = vmatpush.bf16.msra.mxu0 %v778
    %921 = vmatpush.bf16.msra.mxu0 %v770
    %922 = vmatpush.bf16.msra.mxu0 %v762
    %923 = vmatpush.bf16.msra.mxu0 %v754
    %924 = vmatpush.bf16.msra.mxu0 %v746
    %925 = vmatpush.bf16.msra.mxu0 %v738
    %926 = vmatmul.bf16.gmra.mxu0 %v459
    %v927 = vpop.f32.mrf.mxu0
    %v928 = vadd.f32 %v530, %v927
    %v929 = vpop.f32.mrf.mxu0
    %v930 = vadd.f32 %v530, %v929
    %931 = vdwg.mxu0
    %932 = vmatpush.bf16.msra.mxu0 %v795
    %933 = vmatpush.bf16.msra.mxu0 %v787
    %934 = vmatpush.bf16.msra.mxu0 %v779
    %935 = vmatpush.bf16.msra.mxu0 %v771
    %936 = vmatpush.bf16.msra.mxu0 %v763
    %937 = vmatpush.bf16.msra.mxu0 %v755
    %938 = vmatpush.bf16.msra.mxu0 %v747
    %939 = vmatpush.bf16.msra.mxu0 %v739
    %940 = vmatmul.bf16.gmra.mxu0 %v459
    %v941 = vpop.f32.mrf.mxu0
    %v942 = vadd.f32 %v531, %v941
    %v943 = vpop.f32.mrf.mxu0
    %v944 = vadd.f32 %v531, %v943
    %945 = vdwg.mxu0
    %946 = vmatpush.bf16.msra.mxu0 %v796
    %947 = vmatpush.bf16.msra.mxu0 %v788
    %948 = vmatpush.bf16.msra.mxu0 %v780
    %949 = vmatpush.bf16.msra.mxu0 %v772
    %950 = vmatpush.bf16.msra.mxu0 %v764
    %951 = vmatpush.bf16.msra.mxu0 %v756
    %952 = vmatpush.bf16.msra.mxu0 %v748
    %953 = vmatpush.bf16.msra.mxu0 %v740
    %954 = vmatmul.bf16.gmra.mxu0 %v459
    %v955 = vpop.f32.mrf.mxu0
    %v956 = vadd.f32 %v532, %v955
    %v957 = vpop.f32.mrf.mxu0
    %v958 = vadd.f32 %v532, %v957
    %959 = vdwg.mxu0
    %960 = vmatpush.bf16.msra.mxu0 %v797
    %961 = vmatpush.bf16.msra.mxu0 %v789
    %962 = vmatpush.bf16.msra.mxu0 %v781
    %963 = vmatpush.bf16.msra.mxu0 %v773
    %964 = vmatpush.bf16.msra.mxu0 %v765
    %965 = vmatpush.bf16.msra.mxu0 %v757
    %966 = vmatpush.bf16.msra.mxu0 %v749
    %967 = vmatpush.bf16.msra.mxu0 %v741
    %968 = vmatmul.bf16.gmra.mxu0 %v459
    %v969 = vpop.f32.mrf.mxu0
    %v970 = vadd.f32 %v533, %v969
    %v971 = vpop.f32.mrf.mxu0
    %v972 = vadd.f32 %v533, %v971
    %973 = vdwg.mxu0
    %v974 = vmax.f32 %v872, 0.0
    %v975 = vmax.f32 %v886, 0.0
    %v976 = vmax.f32 %v900, 0.0
    %v977 = vmax.f32 %v914, 0.0
    %v978 = vmax.f32 %v928, 0.0
    %v979 = vmax.f32 %v942, 0.0
    %v980 = vmax.f32 %v956, 0.0
    %v981 = vmax.f32 %v970, 0.0
    %v982 = vmax.f32 %v874, 0.0
    %v983 = vmax.f32 %v888, 0.0
    %v984 = vmax.f32 %v902, 0.0
    %v985 = vmax.f32 %v916, 0.0
    %v986 = vmax.f32 %v930, 0.0
    %v987 = vmax.f32 %v944, 0.0
    %v988 = vmax.f32 %v958, 0.0
    %v989 = vmax.f32 %v972, 0.0
    %v990 = vpack.c.bf16 %v982, %v974
    %v991 = vpack.c.bf16 %v983, %v975
    %v992 = vpack.c.bf16 %v984, %v976
    %v993 = vpack.c.bf16 %v985, %v977
    %v994 = vpack.c.bf16 %v986, %v978
    %v995 = vpack.c.bf16 %v987, %v979
    %v996 = vpack.c.bf16 %v988, %v980
    %v997 = vpack.c.bf16 %v989, %v981
    %v998 = vld [vmem:[#allocation9] sm:$0xf]
    %v999 = vld [vmem:[#allocation9 + $0x4] sm:$0xf]
    %v1000 = vld [vmem:[#allocation9 + $0x8] sm:$0xf]
    %v1001 = vld [vmem:[#allocation9 + $0xc] sm:$0xf]
    %v1002 = vld [vmem:[#allocation9 + $0x10] sm:$0xf]
    %v1003 = vld [vmem:[#allocation9 + $0x14] sm:$0xf]
    %v1004 = vld [vmem:[#allocation9 + $0x18] sm:$0xf]
    %v1005 = vld [vmem:[#allocation9 + $0x1c] sm:$0xf]
    %v1006 = vld [vmem:[#allocation9 + $0x20] sm:$0xf]
    %v1007 = vld [vmem:[#allocation9 + $0x24] sm:$0xf]
    %v1008 = vld [vmem:[#allocation9 + $0x28] sm:$0xf]
    %v1009 = vld [vmem:[#allocation9 + $0x2c] sm:$0xf]
    %v1010 = vld [vmem:[#allocation9 + $0x30] sm:$0xf]
    %v1011 = vld [vmem:[#allocation9 + $0x34] sm:$0xf]
    %v1012 = vld [vmem:[#allocation9 + $0x38] sm:$0xf]
    %v1013 = vld [vmem:[#allocation9 + $0x3c] sm:$0xf]
    %v1014 = vld [vmem:[#allocation9 + $0x40] sm:$0xf]
    %v1015 = vld [vmem:[#allocation9 + $0x44] sm:$0xf]
    %v1016 = vld [vmem:[#allocation9 + $0x48] sm:$0xf]
    %v1017 = vld [vmem:[#allocation9 + $0x4c] sm:$0xf]
    %v1018 = vld [vmem:[#allocation9 + $0x50] sm:$0xf]
    %v1019 = vld [vmem:[#allocation9 + $0x54] sm:$0xf]
    %v1020 = vld [vmem:[#allocation9 + $0x58] sm:$0xf]
    %v1021 = vld [vmem:[#allocation9 + $0x5c] sm:$0xf]
    %v1022 = vld [vmem:[#allocation9 + $0x60] sm:$0xf]
    %v1023 = vld [vmem:[#allocation9 + $0x64] sm:$0xf]
    %v1024 = vld [vmem:[#allocation9 + $0x68] sm:$0xf]
    %v1025 = vld [vmem:[#allocation9 + $0x6c] sm:$0xf]
    %v1026 = vld [vmem:[#allocation9 + $0x70] sm:$0xf]
    %v1027 = vld [vmem:[#allocation9 + $0x74] sm:$0xf]
    %v1028 = vld [vmem:[#allocation9 + $0x78] sm:$0xf]
    %v1029 = vld [vmem:[#allocation9 + $0x7c] sm:$0xf]
    %v1030 = vld [vmem:[#allocation9 + $0x80] sm:$0xf]
    %v1031 = vld [vmem:[#allocation9 + $0x84] sm:$0xf]
    %v1032 = vld [vmem:[#allocation9 + $0x88] sm:$0xf]
    %v1033 = vld [vmem:[#allocation9 + $0x8c] sm:$0xf]
    %v1034 = vld [vmem:[#allocation9 + $0x90] sm:$0xf]
    %v1035 = vld [vmem:[#allocation9 + $0x94] sm:$0xf]
    %v1036 = vld [vmem:[#allocation9 + $0x98] sm:$0xf]
    %v1037 = vld [vmem:[#allocation9 + $0x9c] sm:$0xf]
    %v1038 = vld [vmem:[#allocation9 + $0xa0] sm:$0xf]
    %v1039 = vld [vmem:[#allocation9 + $0xa4] sm:$0xf]
    %v1040 = vld [vmem:[#allocation9 + $0xa8] sm:$0xf]
    %v1041 = vld [vmem:[#allocation9 + $0xac] sm:$0xf]
    %v1042 = vld [vmem:[#allocation9 + $0xb0] sm:$0xf]
    %v1043 = vld [vmem:[#allocation9 + $0xb4] sm:$0xf]
    %v1044 = vld [vmem:[#allocation9 + $0xb8] sm:$0xf]
    %v1045 = vld [vmem:[#allocation9 + $0xbc] sm:$0xf]
    %v1046 = vld [vmem:[#allocation9 + $0xc0] sm:$0xf]
    %v1047 = vld [vmem:[#allocation9 + $0xc4] sm:$0xf]
    %v1048 = vld [vmem:[#allocation9 + $0xc8] sm:$0xf]
    %v1049 = vld [vmem:[#allocation9 + $0xcc] sm:$0xf]
    %v1050 = vld [vmem:[#allocation9 + $0xd0] sm:$0xf]
    %v1051 = vld [vmem:[#allocation9 + $0xd4] sm:$0xf]
    %v1052 = vld [vmem:[#allocation9 + $0xd8] sm:$0xf]
    %v1053 = vld [vmem:[#allocation9 + $0xdc] sm:$0xf]
    %v1054 = vld [vmem:[#allocation9 + $0xe0] sm:$0xf]
    %v1055 = vld [vmem:[#allocation9 + $0xe4] sm:$0xf]
    %v1056 = vld [vmem:[#allocation9 + $0xe8] sm:$0xf]
    %v1057 = vld [vmem:[#allocation9 + $0xec] sm:$0xf]
    %v1058 = vld [vmem:[#allocation9 + $0xf0] sm:$0xf]
    %v1059 = vld [vmem:[#allocation9 + $0xf4] sm:$0xf]
    %v1060 = vld [vmem:[#allocation9 + $0xf8] sm:$0xf]
    %v1061 = vld [vmem:[#allocation9 + $0xfc] sm:$0xf]
    %v1062 = vld [vmem:[#allocation9 + $0x100] sm:$0xf]
    %v1063 = vld [vmem:[#allocation9 + $0x104] sm:$0xf]
    %v1064 = vld [vmem:[#allocation9 + $0x108] sm:$0xf]
    %v1065 = vld [vmem:[#allocation9 + $0x10c] sm:$0xf]
    %v1066 = vld [vmem:[#allocation9 + $0x110] sm:$0xf]
    %v1067 = vld [vmem:[#allocation9 + $0x114] sm:$0xf]
    %v1068 = vld [vmem:[#allocation9 + $0x118] sm:$0xf]
    %v1069 = vld [vmem:[#allocation9 + $0x11c] sm:$0xf]
    %v1070 = vld [vmem:[#allocation9 + $0x120] sm:$0xf]
    %v1071 = vld [vmem:[#allocation9 + $0x124] sm:$0xf]
    %v1072 = vld [vmem:[#allocation9 + $0x128] sm:$0xf]
    %v1073 = vld [vmem:[#allocation9 + $0x12c] sm:$0xf]
    %v1074 = vld [vmem:[#allocation9 + $0x130] sm:$0xf]
    %v1075 = vld [vmem:[#allocation9 + $0x134] sm:$0xf]
    %v1076 = vld [vmem:[#allocation9 + $0x138] sm:$0xf]
    %v1077 = vld [vmem:[#allocation9 + $0x13c] sm:$0xf]
    %v1078 = vld [vmem:[#allocation9 + $0x140] sm:$0xf]
    %v1079 = vld [vmem:[#allocation9 + $0x144] sm:$0xf]
    %v1080 = vld [vmem:[#allocation9 + $0x148] sm:$0xf]
    %v1081 = vld [vmem:[#allocation9 + $0x14c] sm:$0xf]
    %v1082 = vld [vmem:[#allocation9 + $0x150] sm:$0xf]
    %v1083 = vld [vmem:[#allocation9 + $0x154] sm:$0xf]
    %v1084 = vld [vmem:[#allocation9 + $0x158] sm:$0xf]
    %v1085 = vld [vmem:[#allocation9 + $0x15c] sm:$0xf]
    %v1086 = vld [vmem:[#allocation9 + $0x160] sm:$0xf]
    %v1087 = vld [vmem:[#allocation9 + $0x164] sm:$0xf]
    %v1088 = vld [vmem:[#allocation9 + $0x168] sm:$0xf]
    %v1089 = vld [vmem:[#allocation9 + $0x16c] sm:$0xf]
    %v1090 = vld [vmem:[#allocation9 + $0x170] sm:$0xf]
    %v1091 = vld [vmem:[#allocation9 + $0x174] sm:$0xf]
    %v1092 = vld [vmem:[#allocation9 + $0x178] sm:$0xf]
    %v1093 = vld [vmem:[#allocation9 + $0x17c] sm:$0xf]
    %v1094 = vld [vmem:[#allocation9 + $0x180] sm:$0xf]
    %v1095 = vld [vmem:[#allocation9 + $0x184] sm:$0xf]
    %v1096 = vld [vmem:[#allocation9 + $0x188] sm:$0xf]
    %v1097 = vld [vmem:[#allocation9 + $0x18c] sm:$0xf]
    %v1098 = vld [vmem:[#allocation9 + $0x190] sm:$0xf]
    %v1099 = vld [vmem:[#allocation9 + $0x194] sm:$0xf]
    %v1100 = vld [vmem:[#allocation9 + $0x198] sm:$0xf]
    %v1101 = vld [vmem:[#allocation9 + $0x19c] sm:$0xf]
    %v1102 = vld [vmem:[#allocation9 + $0x1a0] sm:$0xf]
    %v1103 = vld [vmem:[#allocation9 + $0x1a4] sm:$0xf]
    %v1104 = vld [vmem:[#allocation9 + $0x1a8] sm:$0xf]
    %v1105 = vld [vmem:[#allocation9 + $0x1ac] sm:$0xf]
    %v1106 = vld [vmem:[#allocation9 + $0x1b0] sm:$0xf]
    %v1107 = vld [vmem:[#allocation9 + $0x1b4] sm:$0xf]
    %v1108 = vld [vmem:[#allocation9 + $0x1b8] sm:$0xf]
    %v1109 = vld [vmem:[#allocation9 + $0x1bc] sm:$0xf]
    %v1110 = vld [vmem:[#allocation9 + $0x1c0] sm:$0xf]
    %v1111 = vld [vmem:[#allocation9 + $0x1c4] sm:$0xf]
    %v1112 = vld [vmem:[#allocation9 + $0x1c8] sm:$0xf]
    %v1113 = vld [vmem:[#allocation9 + $0x1cc] sm:$0xf]
    %v1114 = vld [vmem:[#allocation9 + $0x1d0] sm:$0xf]
    %v1115 = vld [vmem:[#allocation9 + $0x1d4] sm:$0xf]
    %v1116 = vld [vmem:[#allocation9 + $0x1d8] sm:$0xf]
    %v1117 = vld [vmem:[#allocation9 + $0x1dc] sm:$0xf]
    %v1118 = vld [vmem:[#allocation9 + $0x1e0] sm:$0xf]
    %v1119 = vld [vmem:[#allocation9 + $0x1e4] sm:$0xf]
    %v1120 = vld [vmem:[#allocation9 + $0x1e8] sm:$0xf]
    %v1121 = vld [vmem:[#allocation9 + $0x1ec] sm:$0xf]
    %v1122 = vld [vmem:[#allocation9 + $0x1f0] sm:$0xf]
    %v1123 = vld [vmem:[#allocation9 + $0x1f4] sm:$0xf]
    %v1124 = vld [vmem:[#allocation9 + $0x1f8] sm:$0xf]
    %v1125 = vld [vmem:[#allocation9 + $0x1fc] sm:$0xf]
    %v1126 = vld [vmem:[%s11] sm:$0x1]
    %v1128 = vperm.slane %v1126, 0
    %v1258 = vunpack.c.l.b16 %v998
    %v1259 = vunpack.c.l.b16 %v999
    %v1260 = vunpack.c.l.b16 %v1000
    %v1261 = vunpack.c.l.b16 %v1001
    %v1262 = vunpack.c.l.b16 %v1002
    %v1263 = vunpack.c.l.b16 %v1003
    %v1264 = vunpack.c.l.b16 %v1004
    %v1265 = vunpack.c.l.b16 %v1005
    %v1266 = vunpack.c.l.b16 %v1006
    %v1267 = vunpack.c.l.b16 %v1007
    %v1268 = vunpack.c.l.b16 %v1008
    %v1269 = vunpack.c.l.b16 %v1009
    %v1270 = vunpack.c.l.b16 %v1010
    %v1271 = vunpack.c.l.b16 %v1011
    %v1272 = vunpack.c.l.b16 %v1012
    %v1273 = vunpack.c.l.b16 %v1013
    %v1274 = vunpack.c.l.b16 %v1014
    %v1275 = vunpack.c.l.b16 %v1015
    %v1276 = vunpack.c.l.b16 %v1016
    %v1277 = vunpack.c.l.b16 %v1017
    %v1278 = vunpack.c.l.b16 %v1018
    %v1279 = vunpack.c.l.b16 %v1019
    %v1280 = vunpack.c.l.b16 %v1020
    %v1281 = vunpack.c.l.b16 %v1021
    %v1282 = vunpack.c.l.b16 %v1022
    %v1283 = vunpack.c.l.b16 %v1023
    %v1284 = vunpack.c.l.b16 %v1024
    %v1285 = vunpack.c.l.b16 %v1025
    %v1286 = vunpack.c.l.b16 %v1026
    %v1287 = vunpack.c.l.b16 %v1027
    %v1288 = vunpack.c.l.b16 %v1028
    %v1289 = vunpack.c.l.b16 %v1029
    %v1290 = vunpack.c.l.b16 %v1030
    %v1291 = vunpack.c.l.b16 %v1031
    %v1292 = vunpack.c.l.b16 %v1032
    %v1293 = vunpack.c.l.b16 %v1033
    %v1294 = vunpack.c.l.b16 %v1034
    %v1295 = vunpack.c.l.b16 %v1035
    %v1296 = vunpack.c.l.b16 %v1036
    %v1297 = vunpack.c.l.b16 %v1037
    %v1298 = vunpack.c.l.b16 %v1038
    %v1299 = vunpack.c.l.b16 %v1039
    %v1300 = vunpack.c.l.b16 %v1040
    %v1301 = vunpack.c.l.b16 %v1041
    %v1302 = vunpack.c.l.b16 %v1042
    %v1303 = vunpack.c.l.b16 %v1043
    %v1304 = vunpack.c.l.b16 %v1044
    %v1305 = vunpack.c.l.b16 %v1045
    %v1306 = vunpack.c.l.b16 %v1046
    %v1307 = vunpack.c.l.b16 %v1047
    %v1308 = vunpack.c.l.b16 %v1048
    %v1309 = vunpack.c.l.b16 %v1049
    %v1310 = vunpack.c.l.b16 %v1050
    %v1311 = vunpack.c.l.b16 %v1051
    %v1312 = vunpack.c.l.b16 %v1052
    %v1313 = vunpack.c.l.b16 %v1053
    %v1314 = vunpack.c.l.b16 %v1054
    %v1315 = vunpack.c.l.b16 %v1055
    %v1316 = vunpack.c.l.b16 %v1056
    %v1317 = vunpack.c.l.b16 %v1057
    %v1318 = vunpack.c.l.b16 %v1058
    %v1319 = vunpack.c.l.b16 %v1059
    %v1320 = vunpack.c.l.b16 %v1060
    %v1321 = vunpack.c.l.b16 %v1061
    %v1322 = vunpack.c.l.b16 %v1062
    %v1323 = vunpack.c.l.b16 %v1063
    %v1324 = vunpack.c.l.b16 %v1064
    %v1325 = vunpack.c.l.b16 %v1065
    %v1326 = vunpack.c.l.b16 %v1066
    %v1327 = vunpack.c.l.b16 %v1067
    %v1328 = vunpack.c.l.b16 %v1068
    %v1329 = vunpack.c.l.b16 %v1069
    %v1330 = vunpack.c.l.b16 %v1070
    %v1331 = vunpack.c.l.b16 %v1071
    %v1332 = vunpack.c.l.b16 %v1072
    %v1333 = vunpack.c.l.b16 %v1073
    %v1334 = vunpack.c.l.b16 %v1074
    %v1335 = vunpack.c.l.b16 %v1075
    %v1336 = vunpack.c.l.b16 %v1076
    %v1337 = vunpack.c.l.b16 %v1077
    %v1338 = vunpack.c.l.b16 %v1078
    %v1339 = vunpack.c.l.b16 %v1079
    %v1340 = vunpack.c.l.b16 %v1080
    %v1341 = vunpack.c.l.b16 %v1081
    %v1342 = vunpack.c.l.b16 %v1082
    %v1343 = vunpack.c.l.b16 %v1083
    %v1344 = vunpack.c.l.b16 %v1084
    %v1345 = vunpack.c.l.b16 %v1085
    %v1346 = vunpack.c.l.b16 %v1086
    %v1347 = vunpack.c.l.b16 %v1087
    %v1348 = vunpack.c.l.b16 %v1088
    %v1349 = vunpack.c.l.b16 %v1089
    %v1350 = vunpack.c.l.b16 %v1090
    %v1351 = vunpack.c.l.b16 %v1091
    %v1352 = vunpack.c.l.b16 %v1092
    %v1353 = vunpack.c.l.b16 %v1093
    %v1354 = vunpack.c.l.b16 %v1094
    %v1355 = vunpack.c.l.b16 %v1095
    %v1356 = vunpack.c.l.b16 %v1096
    %v1357 = vunpack.c.l.b16 %v1097
    %v1358 = vunpack.c.l.b16 %v1098
    %v1359 = vunpack.c.l.b16 %v1099
    %v1360 = vunpack.c.l.b16 %v1100
    %v1361 = vunpack.c.l.b16 %v1101
    %v1362 = vunpack.c.l.b16 %v1102
    %v1363 = vunpack.c.l.b16 %v1103
    %v1364 = vunpack.c.l.b16 %v1104
    %v1365 = vunpack.c.l.b16 %v1105
    %v1366 = vunpack.c.l.b16 %v1106
    %v1367 = vunpack.c.l.b16 %v1107
    %v1368 = vunpack.c.l.b16 %v1108
    %v1369 = vunpack.c.l.b16 %v1109
    %v1370 = vunpack.c.l.b16 %v1110
    %v1371 = vunpack.c.l.b16 %v1111
    %v1372 = vunpack.c.l.b16 %v1112
    %v1373 = vunpack.c.l.b16 %v1113
    %v1374 = vunpack.c.l.b16 %v1114
    %v1375 = vunpack.c.l.b16 %v1115
    %v1376 = vunpack.c.l.b16 %v1116
    %v1377 = vunpack.c.l.b16 %v1117
    %v1378 = vunpack.c.l.b16 %v1118
    %v1379 = vunpack.c.l.b16 %v1119
    %v1380 = vunpack.c.l.b16 %v1120
    %v1381 = vunpack.c.l.b16 %v1121
    %v1382 = vunpack.c.l.b16 %v1122
    %v1383 = vunpack.c.l.b16 %v1123
    %v1384 = vunpack.c.l.b16 %v1124
    %v1385 = vunpack.c.l.b16 %v1125
    %v1386 = vpack.c.b16 %v1259, %v1258
    %v1387 = vpack.c.b16 %v1261, %v1260
    %v1388 = vpack.c.b16 %v1263, %v1262
    %v1389 = vpack.c.b16 %v1265, %v1264
    %v1390 = vpack.c.b16 %v1267, %v1266
    %v1391 = vpack.c.b16 %v1269, %v1268
    %v1392 = vpack.c.b16 %v1271, %v1270
    %v1393 = vpack.c.b16 %v1273, %v1272
    %v1394 = vpack.c.b16 %v1275, %v1274
    %v1395 = vpack.c.b16 %v1277, %v1276
    %v1396 = vpack.c.b16 %v1279, %v1278
    %v1397 = vpack.c.b16 %v1281, %v1280
    %v1398 = vpack.c.b16 %v1283, %v1282
    %v1399 = vpack.c.b16 %v1285, %v1284
    %v1400 = vpack.c.b16 %v1287, %v1286
    %v1401 = vpack.c.b16 %v1289, %v1288
    %v1402 = vpack.c.b16 %v1291, %v1290
    %v1403 = vpack.c.b16 %v1293, %v1292
    %v1404 = vpack.c.b16 %v1295, %v1294
    %v1405 = vpack.c.b16 %v1297, %v1296
    %v1406 = vpack.c.b16 %v1299, %v1298
    %v1407 = vpack.c.b16 %v1301, %v1300
    %v1408 = vpack.c.b16 %v1303, %v1302
    %v1409 = vpack.c.b16 %v1305, %v1304
    %v1410 = vpack.c.b16 %v1307, %v1306
    %v1411 = vpack.c.b16 %v1309, %v1308
    %v1412 = vpack.c.b16 %v1311, %v1310
    %v1413 = vpack.c.b16 %v1313, %v1312
    %v1414 = vpack.c.b16 %v1315, %v1314
    %v1415 = vpack.c.b16 %v1317, %v1316
    %v1416 = vpack.c.b16 %v1319, %v1318
    %v1417 = vpack.c.b16 %v1321, %v1320
    %v1418 = vpack.c.b16 %v1323, %v1322
    %v1419 = vpack.c.b16 %v1325, %v1324
    %v1420 = vpack.c.b16 %v1327, %v1326
    %v1421 = vpack.c.b16 %v1329, %v1328
    %v1422 = vpack.c.b16 %v1331, %v1330
    %v1423 = vpack.c.b16 %v1333, %v1332
    %v1424 = vpack.c.b16 %v1335, %v1334
    %v1425 = vpack.c.b16 %v1337, %v1336
    %v1426 = vpack.c.b16 %v1339, %v1338
    %v1427 = vpack.c.b16 %v1341, %v1340
    %v1428 = vpack.c.b16 %v1343, %v1342
    %v1429 = vpack.c.b16 %v1345, %v1344
    %v1430 = vpack.c.b16 %v1347, %v1346
    %v1431 = vpack.c.b16 %v1349, %v1348
    %v1432 = vpack.c.b16 %v1351, %v1350
    %v1433 = vpack.c.b16 %v1353, %v1352
    %v1434 = vpack.c.b16 %v1355, %v1354
    %v1435 = vpack.c.b16 %v1357, %v1356
    %v1436 = vpack.c.b16 %v1359, %v1358
    %v1437 = vpack.c.b16 %v1361, %v1360
    %v1438 = vpack.c.b16 %v1363, %v1362
    %v1439 = vpack.c.b16 %v1365, %v1364
    %v1440 = vpack.c.b16 %v1367, %v1366
    %v1441 = vpack.c.b16 %v1369, %v1368
    %v1442 = vpack.c.b16 %v1371, %v1370
    %v1443 = vpack.c.b16 %v1373, %v1372
    %v1444 = vpack.c.b16 %v1375, %v1374
    %v1445 = vpack.c.b16 %v1377, %v1376
    %v1446 = vpack.c.b16 %v1379, %v1378
    %v1447 = vpack.c.b16 %v1381, %v1380
    %v1448 = vpack.c.b16 %v1383, %v1382
    %v1449 = vpack.c.b16 %v1385, %v1384
    %1514 = vmatpush.bf16.msra.mxu0 %v1393
    %1515 = vmatpush.bf16.msra.mxu0 %v1392
    %1516 = vmatpush.bf16.msra.mxu0 %v1391
    %1517 = vmatpush.bf16.msra.mxu0 %v1390
    %1518 = vmatpush.bf16.msra.mxu0 %v1389
    %1519 = vmatpush.bf16.msra.mxu0 %v1388
    %1520 = vmatpush.bf16.msra.mxu0 %v1387
    %1521 = vmatpush.bf16.msra.mxu0 %v1386
    %1522 = vmatmul.bf16.gmra.mxu0 %v990
    %v1523 = vpop.f32.mrf.mxu0
    %v1524 = vadd.f32 %v1128, %v1523
    %v1525 = vpop.f32.mrf.mxu0
    %v1526 = vadd.f32 %v1128, %v1525
    %1527 = vdwg.mxu0
    %1528 = vmatpush.bf16.msra.mxu0 %v1401
    %1529 = vmatpush.bf16.msra.mxu0 %v1400
    %1530 = vmatpush.bf16.msra.mxu0 %v1399
    %1531 = vmatpush.bf16.msra.mxu0 %v1398
    %1532 = vmatpush.bf16.msra.mxu0 %v1397
    %1533 = vmatpush.bf16.msra.mxu0 %v1396
    %1534 = vmatpush.bf16.msra.mxu0 %v1395
    %1535 = vmatpush.bf16.msra.mxu0 %v1394
    %1536 = vmatmul.bf16.gmra.mxu0 %v991
    %v1537 = vpop.f32.mrf.mxu0
    %v1538 = vadd.f32 %v1524, %v1537
    %v1539 = vpop.f32.mrf.mxu0
    %v1540 = vadd.f32 %v1526, %v1539
    %1541 = vdwg.mxu0
    %1542 = vmatpush.bf16.msra.mxu0 %v1409
    %1543 = vmatpush.bf16.msra.mxu0 %v1408
    %1544 = vmatpush.bf16.msra.mxu0 %v1407
    %1545 = vmatpush.bf16.msra.mxu0 %v1406
    %1546 = vmatpush.bf16.msra.mxu0 %v1405
    %1547 = vmatpush.bf16.msra.mxu0 %v1404
    %1548 = vmatpush.bf16.msra.mxu0 %v1403
    %1549 = vmatpush.bf16.msra.mxu0 %v1402
    %1550 = vmatmul.bf16.gmra.mxu0 %v992
    %v1551 = vpop.f32.mrf.mxu0
    %v1552 = vadd.f32 %v1538, %v1551
    %v1553 = vpop.f32.mrf.mxu0
    %v1554 = vadd.f32 %v1540, %v1553
    %1555 = vdwg.mxu0
    %1556 = vmatpush.bf16.msra.mxu0 %v1417
    %1557 = vmatpush.bf16.msra.mxu0 %v1416
    %1558 = vmatpush.bf16.msra.mxu0 %v1415
    %1559 = vmatpush.bf16.msra.mxu0 %v1414
    %1560 = vmatpush.bf16.msra.mxu0 %v1413
    %1561 = vmatpush.bf16.msra.mxu0 %v1412
    %1562 = vmatpush.bf16.msra.mxu0 %v1411
    %1563 = vmatpush.bf16.msra.mxu0 %v1410
    %1564 = vmatmul.bf16.gmra.mxu0 %v993
    %v1565 = vpop.f32.mrf.mxu0
    %v1566 = vadd.f32 %v1552, %v1565
    %v1567 = vpop.f32.mrf.mxu0
    %v1568 = vadd.f32 %v1554, %v1567
    %1569 = vdwg.mxu0
    %1570 = vmatpush.bf16.msra.mxu0 %v1425
    %1571 = vmatpush.bf16.msra.mxu0 %v1424
    %1572 = vmatpush.bf16.msra.mxu0 %v1423
    %1573 = vmatpush.bf16.msra.mxu0 %v1422
    %1574 = vmatpush.bf16.msra.mxu0 %v1421
    %1575 = vmatpush.bf16.msra.mxu0 %v1420
    %1576 = vmatpush.bf16.msra.mxu0 %v1419
    %1577 = vmatpush.bf16.msra.mxu0 %v1418
    %1578 = vmatmul.bf16.gmra.mxu0 %v994
    %v1579 = vpop.f32.mrf.mxu0
    %v1580 = vadd.f32 %v1566, %v1579
    %v1581 = vpop.f32.mrf.mxu0
    %v1582 = vadd.f32 %v1568, %v1581
    %1583 = vdwg.mxu0
    %1584 = vmatpush.bf16.msra.mxu0 %v1433
    %1585 = vmatpush.bf16.msra.mxu0 %v1432
    %1586 = vmatpush.bf16.msra.mxu0 %v1431
    %1587 = vmatpush.bf16.msra.mxu0 %v1430
    %1588 = vmatpush.bf16.msra.mxu0 %v1429
    %1589 = vmatpush.bf16.msra.mxu0 %v1428
    %1590 = vmatpush.bf16.msra.mxu0 %v1427
    %1591 = vmatpush.bf16.msra.mxu0 %v1426
    %1592 = vmatmul.bf16.gmra.mxu0 %v995
    %v1593 = vpop.f32.mrf.mxu0
    %v1594 = vadd.f32 %v1580, %v1593
    %v1595 = vpop.f32.mrf.mxu0
    %v1596 = vadd.f32 %v1582, %v1595
    %1597 = vdwg.mxu0
    %1598 = vmatpush.bf16.msra.mxu0 %v1441
    %1599 = vmatpush.bf16.msra.mxu0 %v1440
    %1600 = vmatpush.bf16.msra.mxu0 %v1439
    %1601 = vmatpush.bf16.msra.mxu0 %v1438
    %1602 = vmatpush.bf16.msra.mxu0 %v1437
    %1603 = vmatpush.bf16.msra.mxu0 %v1436
    %1604 = vmatpush.bf16.msra.mxu0 %v1435
    %1605 = vmatpush.bf16.msra.mxu0 %v1434
    %1606 = vmatmul.bf16.gmra.mxu0 %v996
    %v1607 = vpop.f32.mrf.mxu0
    %v1608 = vadd.f32 %v1594, %v1607
    %v1609 = vpop.f32.mrf.mxu0
    %v1610 = vadd.f32 %v1596, %v1609
    %1611 = vdwg.mxu0
    %1612 = vmatpush.bf16.msra.mxu0 %v1449
    %1613 = vmatpush.bf16.msra.mxu0 %v1448
    %1614 = vmatpush.bf16.msra.mxu0 %v1447
    %1615 = vmatpush.bf16.msra.mxu0 %v1446
    %1616 = vmatpush.bf16.msra.mxu0 %v1445
    %1617 = vmatpush.bf16.msra.mxu0 %v1444
    %1618 = vmatpush.bf16.msra.mxu0 %v1443
    %1619 = vmatpush.bf16.msra.mxu0 %v1442
    %1620 = vmatmul.bf16.gmra.mxu0 %v997
    %v1621 = vpop.f32.mrf.mxu0
    %v1622 = vadd.f32 %v1608, %v1621
    %v1623 = vpop.f32.mrf.mxu0
    %v1624 = vadd.f32 %v1610, %v1623
    %1625 = vdwg.mxu0
    %v1626 = vxor.u32 %v1622, 2147483648
    %v1627 = vxor.u32 %v1624, 2147483648
    %v1628 = vmul.f32 %v1626, 1.442695
    %v1629 = vpow.pop %v1628
    %v1630 = vmul.f32 %v1627, 1.442695
    %v1631 = vpow.pop %v1630
    %v1632 = vadd.f32 %v1629, 1.0
    %v1633 = vadd.f32 %v1631, 1.0
    %v1634 = vrcp.pop %v1632
    %v1635 = vmul.f32 %v1632, %v1634
    %v1636 = vsub.f32 1.0, %v1635
    %v1637 = vmul.f32 %v1634, %v1636
    %v1638 = vadd.f32 %v1634, %v1637
    %vm1639 = vweird.f32 %v1632
    %vm1640 = vweird.f32 %v1634
    %vm1641 = vmor %vm1639, %vm1640
    %v1642 = vsel %vm1641, %v1634, %v1638
    %v1643 = vand.u32 2147483647, %v1632
    %vm1644 = vcmp.eq.f32.partialorder %v1643, 8.507059e+37
    %v1645 = vand.u32 %v1632, 2147483648
    %v1646 = vor.u32 1.1754944e-38, %v1645
    %v1647 = vsel %vm1644, %v1646, %v1642
    %v1648 = vmul.f32 1.0, %v1647
    %v1649 = vrcp.pop %v1633
    %v1650 = vmul.f32 %v1633, %v1649
    %v1651 = vsub.f32 1.0, %v1650
    %v1652 = vmul.f32 %v1649, %v1651
    %v1653 = vadd.f32 %v1649, %v1652
    %vm1654 = vweird.f32 %v1633
    %vm1655 = vweird.f32 %v1649
    %vm1656 = vmor %vm1654, %vm1655
    %v1657 = vsel %vm1656, %v1649, %v1653
    %v1658 = vand.u32 2147483647, %v1633
    %vm1659 = vcmp.eq.f32.partialorder %v1658, 8.507059e+37
    %v1660 = vand.u32 %v1633, 2147483648
    %v1661 = vor.u32 1.1754944e-38, %v1660
    %v1662 = vsel %vm1659, %v1661, %v1657
    %v1663 = vmul.f32 1.0, %v1662
    %1664 = vst [vmem:[%s12] sm:$0xff] %v1648
    %1665 = vst [vmem:[%s12 + $0x8] sm:$0xff] %v1663
    // Predicated region
    $region70: #{gcn_model_forward.1} parent=1 // pred_check
      _
    $region71: #{gcn_model_forward.1} parent=1 // pred_check_branch
      %1667 = sbr.rel (0) target = $region73
    $region72: #{gcn_model_forward.1} parent=1 // pred_region
      _
    $region73: #{gcn_model_forward.1} parent=1 // pred_fallthru
      _
    // Predicated region
    $region74: #{gcn_model_forward.1} parent=1 // pred_check
      _
    $region75: #{gcn_model_forward.1} parent=1 // pred_check_branch
      %1669 = sbr.rel (0) target = $region77
    $region76: #{gcn_model_forward.1} parent=1 // pred_region
      _
    $region77: #{gcn_model_forward.1} parent=1 // pred_fallthru
      _
    %1670 = vsyncpa [#allocation3], 1
    %1671 = vsyncpa [#allocation5], 1
    %1672 = vsyncpa [#allocation8], 1

</llo_original>
